<compile_context>
chip_gen: v7x
topology: tpu7x:2x2x1
jax: 0.10.0
libtpu: 0.0.40
codegen_flags: <defaults>
</compile_context>

<pallas_src>
import functools
import math

import numpy as np
import jax
import jax.numpy as jnp
from jax import lax
from jax.experimental import pallas as pl
from jax.experimental.pallas import tpu as pltpu


# ---------------------------------------------------------------------------
# Host-side interpolation matrices (PyTorch Upsample bilinear, align_corners=False)
# ---------------------------------------------------------------------------
@functools.lru_cache(maxsize=None)
def _bilinear_matrix(in_size: int, out_size: int) -> np.ndarray:
    """Row-stochastic (out_size, in_size) matrix for one axis of torch bilinear
    upsampling with align_corners=False (half-pixel centers, negative coords clamped)."""
    ratio = np.float32(in_size / out_size)
    dst = np.arange(out_size, dtype=np.float32)
    src = np.maximum((dst + np.float32(0.5)) * ratio - np.float32(0.5), np.float32(0.0))
    i0 = np.floor(src).astype(np.int64)
    i1 = np.minimum(i0 + 1, in_size - 1)
    frac = (src - i0).astype(np.float32)
    m = np.zeros((out_size, in_size), dtype=np.float32)
    rows = np.arange(out_size)
    m[rows, i0] += (1.0 - frac)
    m[rows, i1] += frac
    return m


# ---------------------------------------------------------------------------
# Tile selection for the H_out grid axis
# ---------------------------------------------------------------------------
def _pick_tile_hout(B, C_in, C_out, H, W, H_out, W_out,
                    itemsize=4, vmem_budget=12 * 1024 * 1024, min_steps=4):
    """Largest H_out tile that (a) satisfies the (8,128) block rules, (b) fits a
    conservative VMEM budget with double-buffering, and (c) still yields a few
    grid steps so the pipeline / megacore have something to overlap."""
    cands = [t for t in range(8, H_out + 1, 8)
             if H_out % t == 0 and (t * W_out) % 128 == 0]
    cands.append(H_out)                      # full-extent block is always legal
    cands = sorted(set(cands))

    def vmem_bytes(t):
        x_blk = C_in * H * W * itemsize
        o_blk = C_out * t * W_out * itemsize
        wh_blk = t * H * itemsize
        wwt_blk = W * W_out * itemsize
        conv_sc = C_out * H * W * itemsize                       # persistent scratch
        interm = (H * W + t * W + t * W_out + C_out * t * W_out) * 4
        return 2 * (x_blk + o_blk + wh_blk + wwt_blk) + conv_sc + interm

    fitting = [t for t in cands if vmem_bytes(t) <= vmem_budget] or [cands[0]]
    preferred = [t for t in fitting if B * (H_out // t) >= min_steps]
    return max(preferred) if preferred else max(fitting)


# ---------------------------------------------------------------------------
# Kernels
# ---------------------------------------------------------------------------
def _fused_kernel_small(x_ref, wh_ref, wwt_ref, w_ref, b_ref, o_ref, conv_sc):
    """Small-channel path: unrolled VPU conv (cached per batch) + per-channel
    2-D MXU upsample matmuls.

    x_ref   : (1, C_in, H, W)      VMEM   (same block for every row tile of a batch)
    wh_ref  : (T, H)               VMEM   (tile of the H-interpolation matrix)
    wwt_ref : (W, W_out)           VMEM   (transposed W-interpolation matrix)
    w_ref   : (C_out, C_in)        SMEM   (scalar reads)
    b_ref   : (C_out,)             SMEM
    o_ref   : (1, C_out, T*W_out)  VMEM   lane-dense output slab
    conv_sc : (C_out, H, W)        VMEM   persistent scratch (conv result of this batch)
    """
    c_in = x_ref.shape[1]
    c_out = o_ref.shape[1]
    t = wh_ref.shape[0]
    w_out = wwt_ref.shape[1]

    # 1x1 conv: compute once per batch (first row-tile step), reuse across row tiles.
    @pl.when(pl.program_id(1) == 0)
    def _():
        for co in range(c_out):               # unrolled: c_out is tiny on this path
            # VPU FMAs with SMEM scalar weights — no reshape of x, no padded MXU pass.
            acc = w_ref[co, 0] * x_ref[0, 0]
            for ci in range(1, c_in):
                acc = acc + w_ref[co, ci] * x_ref[0, ci]
            conv_sc[co] = acc + b_ref[co]                           # (H, W)

    planes = []
    for co in range(c_out):
        # Upsample rows then columns: two plain 2-D MXU matmuls; W / W_out stay on
        # lanes so no XLU lane transpose is ever needed.
        z = jnp.dot(wh_ref[...], conv_sc[co],
                    preferred_element_type=jnp.float32,
                    precision=lax.Precision.HIGHEST)                # (T, W)
        r = jnp.dot(z, wwt_ref[...],
                    preferred_element_type=jnp.float32,
                    precision=lax.Precision.HIGHEST)                # (T, W_out)
        planes.append(r)

    out = jnp.stack(planes, axis=0)               # (C_out, T, W_out)
    # Single relayout into the lane-dense output slab -> unmasked 128-lane stores
    # and a contiguous writeback DMA.
    o_ref[0] = out.reshape(c_out, t * w_out).astype(o_ref.dtype)


def _fused_kernel_generic(x_ref, wh_ref, wwt_ref, w_ref, b_ref, o_ref, conv_sc):
    """Fallback for larger channel counts: channel-mix matmul on the MXU (cached
    per batch in conv_sc), then batched spatial-interpolation matmuls.

    w_ref : (C_out, C_in) VMEM, b_ref : (C_out, 1) VMEM; other refs as in the small path.
    """
    c_in, h, w = x_ref.shape[1], x_ref.shape[2], x_ref.shape[3]
    c_out = w_ref.shape[0]
    t = wh_ref.shape[0]
    w_out = wwt_ref.shape[1]

    @pl.when(pl.program_id(1) == 0)
    def _():
        x_flat = x_ref[0].reshape(c_in, h * w)
        y = jnp.dot(w_ref[...], x_flat,
                    preferred_element_type=jnp.float32,
                    precision=lax.Precision.HIGHEST) + b_ref[...]  # (C_out, H*W)
        conv_sc[...] = y.reshape(c_out, h, w)

    y = conv_sc[...]                                                # (C_out, H, W)
    tmp = lax.dot_general(y, wwt_ref[...], (((2,), (0,)), ((), ())),
                          preferred_element_type=jnp.float32,
                          precision=lax.Precision.HIGHEST)          # (C_out, H, W_out)
    out = lax.dot_general(tmp, wh_ref[...], (((1,), (1,)), ((), ())),
                          preferred_element_type=jnp.float32,
                          precision=lax.Precision.HIGHEST)          # (C_out, W_out, T)
    out = jnp.transpose(out, (0, 2, 1))                             # (C_out, T, W_out)
    o_ref[0] = out.reshape(c_out, t * w_out).astype(o_ref.dtype)


# ---------------------------------------------------------------------------
# Wrapper
# ---------------------------------------------------------------------------
def upsample_module(x, conv_w, conv_b, scale):
    """x: (B, C_in, H, W) f32 -> (B, C_out, H*scale, W*scale) with C_out = conv_w.shape[0]."""
    B, C_in, H, W = x.shape
    C_out = conv_w.shape[0]
    H_out = int(math.floor(H * scale))
    W_out = int(math.floor(W * scale))

    wh = jnp.asarray(_bilinear_matrix(H, H_out))          # (H_out, H)
    wwt = jnp.asarray(_bilinear_matrix(W, W_out).T)       # (W, W_out)

    tile = _pick_tile_hout(B, C_in, C_out, H, W, H_out, W_out)
    n_h = H_out // tile

    small = (C_in <= 8 and C_out <= 8)
    if small:
        kernel = _fused_kernel_small
        w_arg = conv_w
        b_arg = conv_b.reshape(C_out)
        w_spec = pl.BlockSpec(memory_space=pltpu.MemorySpace.SMEM)
        b_spec = pl.BlockSpec(memory_space=pltpu.MemorySpace.SMEM)
    else:
        kernel = _fused_kernel_generic
        w_arg = conv_w
        b_arg = conv_b.reshape(C_out, 1)
        w_spec = pl.BlockSpec((C_out, C_in), lambda b, j: (0, 0))
        b_spec = pl.BlockSpec((C_out, 1), lambda b, j: (0, 0))

    out_flat = pl.pallas_call(
        kernel,
        out_shape=jax.ShapeDtypeStruct((B, C_out, H_out * W_out), x.dtype),
        grid_spec=pltpu.PrefetchScalarGridSpec(
            num_scalar_prefetch=0,
            grid=(B, n_h),                 # inner axis tiles output rows: x block and
            in_specs=[                     # the cached conv are re-used across it
                pl.BlockSpec((1, C_in, H, W), lambda b, j: (b, 0, 0, 0)),
                pl.BlockSpec((tile, H), lambda b, j: (j, 0)),
                pl.BlockSpec((W, W_out), lambda b, j: (0, 0)),
                w_spec,
                b_spec,
            ],
            out_specs=pl.BlockSpec((1, C_out, tile * W_out),
                                   lambda b, j: (b, 0, j)),
            scratch_shapes=[pltpu.VMEM((C_out, H, W), jnp.float32)],
        ),
        compiler_params=pltpu.CompilerParams(
            # inner axis carries the conv-scratch dependence -> "arbitrary"
            dimension_semantics=("parallel", "arbitrary"),
            vmem_limit_bytes=32 * 1024 * 1024),
    )(x, wh, wwt, w_arg, b_arg)

    # Splitting the flattened spatial dim back to (H_out, W_out) is a free metadata reshape.
    return out_flat.reshape(B, C_out, H_out, W_out)


# ---------------------------------------------------------------------------
# Independent reference (gather-based bilinear, PyTorch align_corners=False semantics)
# ---------------------------------------------------------------------------
def _reference(x, conv_w, conv_b, scale):
    B, C_in, H, W = x.shape
    H_out = int(math.floor(H * scale))
    W_out = int(math.floor(W * scale))
    y = jnp.einsum('oc,bchw->bohw', conv_w, x,
                   precision=lax.Precision.HIGHEST) + conv_b[None, :, None, None]

    def src(out_size, in_size):
        d = jnp.arange(out_size, dtype=jnp.float32)
        s = jnp.maximum((d + 0.5) * (in_size / out_size) - 0.5, 0.0)
        i0 = jnp.floor(s).astype(jnp.int32)
        i1 = jnp.minimum(i0 + 1, in_size - 1)
        return i0, i1, s - i0.astype(jnp.float32)

    h0, h1, fh = src(H_out, H)
    w0, w1, fw = src(W_out, W)
    top = y[:, :, h0, :]
    bot = y[:, :, h1, :]

    def interp_w(p):
        return p[:, :, :, w0] * (1.0 - fw) + p[:, :, :, w1] * fw

    fh = fh[None, None, :, None]
    return interp_w(top) * (1.0 - fh) + interp_w(bot) * fh


if __name__ == "__main__":
    key = jax.random.PRNGKey(0)
    B, C_in, H, W = 2, 4, 16, 16
    scale = 2
    C_out = C_in // 2

    kx, kw, kb = jax.random.split(key, 3)
    x = jax.random.normal(kx, (B, C_in, H, W), dtype=jnp.float32)
    conv_w = jax.random.normal(kw, (C_out, C_in), dtype=jnp.float32) * 0.1
    conv_b = jax.random.normal(kb, (C_out,), dtype=jnp.float32) * 0.1

    out = upsample_module(x, conv_w, conv_b, scale)
    out = jax.block_until_ready(out)

    ref = _reference(x, conv_w, conv_b, scale)
    assert out.shape == (B, C_out, H * scale, W * scale)
    assert jnp.allclose(out, ref, atol=1e-5, rtol=1e-5), \
        float(jnp.max(jnp.abs(out - ref)))

    print("KERNEL_OK")
</pallas_src>

<mosaic_0001>
module attributes {stable_mosaic.version = 11 : i64} {
  func.func @_fused_kernel_small(%arg0: i32, %arg1: i32, %arg2: memref<1x4x16x16xf32, #tpu.memory_space<vmem>>, %arg3: memref<16x16xf32, #tpu.memory_space<vmem>>, %arg4: memref<16x32xf32, #tpu.memory_space<vmem>>, %arg5: memref<2x4xf32, #tpu.memory_space<smem>>, %arg6: memref<2xf32, #tpu.memory_space<smem>>, %arg7: memref<1x2x512xf32, #tpu.memory_space<vmem>>, %arg8: memref<2x16x16xf32, #tpu.memory_space<vmem>>) attributes {dimension_semantics = [#tpu.dimension_semantics<parallel>, #tpu.dimension_semantics<arbitrary>], iteration_bounds = array<i64: 2, 2>, scalar_prefetch = 0 : i64, scratch_operands = 1 : i64, tpu.core_type = #tpu.core_type<tc>, window_params = [{transform_indices = @transform_0, window_bounds = array<i64: 1, 4, 16, 16>}, {transform_indices = @transform_1, window_bounds = array<i64: 16, 16>}, {pipeline_mode = #tpu.pipeline_mode<synchronous>, transform_indices = @transform_2, window_bounds = array<i64: 16, 32>}, {transform_indices = @transform_3, window_bounds = array<i64: 2, 4>}, {transform_indices = @transform_4, window_bounds = array<i64: 2>}, {transform_indices = @transform_5, window_bounds = array<i64: 1, 2, 512>}]} {
    %c0_i32 = arith.constant 0 : i32
    %0 = arith.cmpi eq, %arg1, %c0_i32 : i32
    %1 = arith.extui %0 : i1 to i32
    %c0_i32_0 = arith.constant 0 : i32
    %2 = arith.cmpi ne, %1, %c0_i32_0 : i32
    scf.if %2 {
      %c0_19 = arith.constant 0 : index
      %c0_20 = arith.constant 0 : index
      %22 = memref.load %arg5[%c0_19, %c0_20] : memref<2x4xf32, #tpu.memory_space<smem>>
      %c0_21 = arith.constant 0 : index
      %c0_22 = arith.constant 0 : index
      %c0_23 = arith.constant 0 : index
      %c0_24 = arith.constant 0 : index
      %23 = vector.load %arg2[%c0_21, %c0_22, %c0_23, %c0_24] : memref<1x4x16x16xf32, #tpu.memory_space<vmem>>, vector<1x1x16x16xf32>
      %24 = vector.shape_cast %23 : vector<1x1x16x16xf32> to vector<16x16xf32>
      %25 = vector.broadcast %22 : f32 to vector<16x16xf32>
      %26 = arith.mulf %25, %24 : vector<16x16xf32>
      %c0_25 = arith.constant 0 : index
      %c1_26 = arith.constant 1 : index
      %27 = memref.load %arg5[%c0_25, %c1_26] : memref<2x4xf32, #tpu.memory_space<smem>>
      %c0_27 = arith.constant 0 : index
      %c1_28 = arith.constant 1 : index
      %c0_29 = arith.constant 0 : index
      %c0_30 = arith.constant 0 : index
      %28 = vector.load %arg2[%c0_27, %c1_28, %c0_29, %c0_30] : memref<1x4x16x16xf32, #tpu.memory_space<vmem>>, vector<1x1x16x16xf32>
      %29 = vector.shape_cast %28 : vector<1x1x16x16xf32> to vector<16x16xf32>
      %30 = vector.broadcast %27 : f32 to vector<16x16xf32>
      %31 = arith.mulf %30, %29 : vector<16x16xf32>
      %32 = arith.addf %26, %31 : vector<16x16xf32>
      %c0_31 = arith.constant 0 : index
      %c2 = arith.constant 2 : index
      %33 = memref.load %arg5[%c0_31, %c2] : memref<2x4xf32, #tpu.memory_space<smem>>
      %c0_32 = arith.constant 0 : index
      %c2_33 = arith.constant 2 : index
      %c0_34 = arith.constant 0 : index
      %c0_35 = arith.constant 0 : index
      %34 = vector.load %arg2[%c0_32, %c2_33, %c0_34, %c0_35] : memref<1x4x16x16xf32, #tpu.memory_space<vmem>>, vector<1x1x16x16xf32>
      %35 = vector.shape_cast %34 : vector<1x1x16x16xf32> to vector<16x16xf32>
      %36 = vector.broadcast %33 : f32 to vector<16x16xf32>
      %37 = arith.mulf %36, %35 : vector<16x16xf32>
      %38 = arith.addf %32, %37 : vector<16x16xf32>
      %c0_36 = arith.constant 0 : index
      %c3 = arith.constant 3 : index
      %39 = memref.load %arg5[%c0_36, %c3] : memref<2x4xf32, #tpu.memory_space<smem>>
      %c0_37 = arith.constant 0 : index
      %c3_38 = arith.constant 3 : index
      %c0_39 = arith.constant 0 : index
      %c0_40 = arith.constant 0 : index
      %40 = vector.load %arg2[%c0_37, %c3_38, %c0_39, %c0_40] : memref<1x4x16x16xf32, #tpu.memory_space<vmem>>, vector<1x1x16x16xf32>
      %41 = vector.shape_cast %40 : vector<1x1x16x16xf32> to vector<16x16xf32>
      %42 = vector.broadcast %39 : f32 to vector<16x16xf32>
      %43 = arith.mulf %42, %41 : vector<16x16xf32>
      %44 = arith.addf %38, %43 : vector<16x16xf32>
      %c0_41 = arith.constant 0 : index
      %45 = memref.load %arg6[%c0_41] : memref<2xf32, #tpu.memory_space<smem>>
      %46 = vector.broadcast %45 : f32 to vector<16x16xf32>
      %47 = arith.addf %44, %46 : vector<16x16xf32>
      %c0_42 = arith.constant 0 : index
      %c0_43 = arith.constant 0 : index
      %c0_44 = arith.constant 0 : index
      %48 = vector.load %arg8[%c0_42, %c0_43, %c0_44] : memref<2x16x16xf32, #tpu.memory_space<vmem>>, vector<1x16x16xf32>
      %49 = vector.shape_cast %48 : vector<1x16x16xf32> to vector<16x16xf32>
      %50 = vector.shape_cast %47 : vector<16x16xf32> to vector<1x16x16xf32>
      tpu.vector_store %arg8[%c0_42, %c0_43, %c0_44], %50 {strides = array<i32>} : memref<2x16x16xf32, #tpu.memory_space<vmem>>, vector<1x16x16xf32>,
      %c1_45 = arith.constant 1 : index
      %c0_46 = arith.constant 0 : index
      %51 = memref.load %arg5[%c1_45, %c0_46] : memref<2x4xf32, #tpu.memory_space<smem>>
      %c0_47 = arith.constant 0 : index
      %c0_48 = arith.constant 0 : index
      %c0_49 = arith.constant 0 : index
      %c0_50 = arith.constant 0 : index
      %52 = vector.load %arg2[%c0_47, %c0_48, %c0_49, %c0_50] : memref<1x4x16x16xf32, #tpu.memory_space<vmem>>, vector<1x1x16x16xf32>
      %53 = vector.shape_cast %52 : vector<1x1x16x16xf32> to vector<16x16xf32>
      %54 = vector.broadcast %51 : f32 to vector<16x16xf32>
      %55 = arith.mulf %54, %53 : vector<16x16xf32>
      %c1_51 = arith.constant 1 : index
      %c1_52 = arith.constant 1 : index
      %56 = memref.load %arg5[%c1_51, %c1_52] : memref<2x4xf32, #tpu.memory_space<smem>>
      %c0_53 = arith.constant 0 : index
      %c1_54 = arith.constant 1 : index
      %c0_55 = arith.constant 0 : index
      %c0_56 = arith.constant 0 : index
      %57 = vector.load %arg2[%c0_53, %c1_54, %c0_55, %c0_56] : memref<1x4x16x16xf32, #tpu.memory_space<vmem>>, vector<1x1x16x16xf32>
      %58 = vector.shape_cast %57 : vector<1x1x16x16xf32> to vector<16x16xf32>
      %59 = vector.broadcast %56 : f32 to vector<16x16xf32>
      %60 = arith.mulf %59, %58 : vector<16x16xf32>
      %61 = arith.addf %55, %60 : vector<16x16xf32>
      %c1_57 = arith.constant 1 : index
      %c2_58 = arith.constant 2 : index
      %62 = memref.load %arg5[%c1_57, %c2_58] : memref<2x4xf32, #tpu.memory_space<smem>>
      %c0_59 = arith.constant 0 : index
      %c2_60 = arith.constant 2 : index
      %c0_61 = arith.constant 0 : index
      %c0_62 = arith.constant 0 : index
      %63 = vector.load %arg2[%c0_59, %c2_60, %c0_61, %c0_62] : memref<1x4x16x16xf32, #tpu.memory_space<vmem>>, vector<1x1x16x16xf32>
      %64 = vector.shape_cast %63 : vector<1x1x16x16xf32> to vector<16x16xf32>
      %65 = vector.broadcast %62 : f32 to vector<16x16xf32>
      %66 = arith.mulf %65, %64 : vector<16x16xf32>
      %67 = arith.addf %61, %66 : vector<16x16xf32>
      %c1_63 = arith.constant 1 : index
      %c3_64 = arith.constant 3 : index
      %68 = memref.load %arg5[%c1_63, %c3_64] : memref<2x4xf32, #tpu.memory_space<smem>>
      %c0_65 = arith.constant 0 : index
      %c3_66 = arith.constant 3 : index
      %c0_67 = arith.constant 0 : index
      %c0_68 = arith.constant 0 : index
      %69 = vector.load %arg2[%c0_65, %c3_66, %c0_67, %c0_68] : memref<1x4x16x16xf32, #tpu.memory_space<vmem>>, vector<1x1x16x16xf32>
      %70 = vector.shape_cast %69 : vector<1x1x16x16xf32> to vector<16x16xf32>
      %71 = vector.broadcast %68 : f32 to vector<16x16xf32>
      %72 = arith.mulf %71, %70 : vector<16x16xf32>
      %73 = arith.addf %67, %72 : vector<16x16xf32>
      %c1_69 = arith.constant 1 : index
      %74 = memref.load %arg6[%c1_69] : memref<2xf32, #tpu.memory_space<smem>>
      %75 = vector.broadcast %74 : f32 to vector<16x16xf32>
      %76 = arith.addf %73, %75 : vector<16x16xf32>
      %c1_70 = arith.constant 1 : index
      %c0_71 = arith.constant 0 : index
      %c0_72 = arith.constant 0 : index
      %77 = vector.load %arg8[%c1_70, %c0_71, %c0_72] : memref<2x16x16xf32, #tpu.memory_space<vmem>>, vector<1x16x16xf32>
      %78 = vector.shape_cast %77 : vector<1x16x16xf32> to vector<16x16xf32>
      %79 = vector.shape_cast %76 : vector<16x16xf32> to vector<1x16x16xf32>
      tpu.vector_store %arg8[%c1_70, %c0_71, %c0_72], %79 {strides = array<i32>} : memref<2x16x16xf32, #tpu.memory_space<vmem>>, vector<1x16x16xf32>,
    } else {
    }
    %c0 = arith.constant 0 : index
    %c0_1 = arith.constant 0 : index
    %3 = vector.load %arg3[%c0, %c0_1] : memref<16x16xf32, #tpu.memory_space<vmem>>, vector<16x16xf32>
    %c0_2 = arith.constant 0 : index
    %c0_3 = arith.constant 0 : index
    %c0_4 = arith.constant 0 : index
    %4 = vector.load %arg8[%c0_2, %c0_3, %c0_4] : memref<2x16x16xf32, #tpu.memory_space<vmem>>, vector<1x16x16xf32>
    %5 = vector.shape_cast %4 : vector<1x16x16xf32> to vector<16x16xf32>
    %cst = arith.constant dense<0.000000e+00> : vector<16x16xf32>
    %6 = tpu.matmul %3, %5, %cst {dimension_numbers = #tpu.dot_dimension_numbers<[1], [0], [0], [1], [0, 0, 1, 1], [], []>, precision = #tpu.contract_precision<fp32>} : vector<16x16xf32>, vector<16x16xf32>, vector<16x16xf32> -> vector<16x16xf32>
    %c0_5 = arith.constant 0 : index
    %c0_6 = arith.constant 0 : index
    %7 = vector.load %arg4[%c0_5, %c0_6] : memref<16x32xf32, #tpu.memory_space<vmem>>, vector<16x32xf32>
    %cst_7 = arith.constant dense<0.000000e+00> : vector<16x32xf32>
    %8 = tpu.matmul %6, %7, %cst_7 {dimension_numbers = #tpu.dot_dimension_numbers<[1], [0], [0], [1], [0, 0, 1, 1], [], []>, precision = #tpu.contract_precision<fp32>} : vector<16x16xf32>, vector<16x32xf32>, vector<16x32xf32> -> vector<16x32xf32>
    %c0_8 = arith.constant 0 : index
    %c0_9 = arith.constant 0 : index
    %9 = vector.load %arg3[%c0_8, %c0_9] : memref<16x16xf32, #tpu.memory_space<vmem>>, vector<16x16xf32>
    %c1 = arith.constant 1 : index
    %c0_10 = arith.constant 0 : index
    %c0_11 = arith.constant 0 : index
    %10 = vector.load %arg8[%c1, %c0_10, %c0_11] : memref<2x16x16xf32, #tpu.memory_space<vmem>>, vector<1x16x16xf32>
    %11 = vector.shape_cast %10 : vector<1x16x16xf32> to vector<16x16xf32>
    %cst_12 = arith.constant dense<0.000000e+00> : vector<16x16xf32>
    %12 = tpu.matmul %9, %11, %cst_12 {dimension_numbers = #tpu.dot_dimension_numbers<[1], [0], [0], [1], [0, 0, 1, 1], [], []>, precision = #tpu.contract_precision<fp32>} : vector<16x16xf32>, vector<16x16xf32>, vector<16x16xf32> -> vector<16x16xf32>
    %c0_13 = arith.constant 0 : index
    %c0_14 = arith.constant 0 : index
    %13 = vector.load %arg4[%c0_13, %c0_14] : memref<16x32xf32, #tpu.memory_space<vmem>>, vector<16x32xf32>
    %cst_15 = arith.constant dense<0.000000e+00> : vector<16x32xf32>
    %14 = tpu.matmul %12, %13, %cst_15 {dimension_numbers = #tpu.dot_dimension_numbers<[1], [0], [0], [1], [0, 0, 1, 1], [], []>, precision = #tpu.contract_precision<fp32>} : vector<16x16xf32>, vector<16x32xf32>, vector<16x32xf32> -> vector<16x32xf32>
    %15 = vector.shape_cast %8 : vector<16x32xf32> to vector<1x16x32xf32>
    %16 = vector.shape_cast %14 : vector<16x32xf32> to vector<1x16x32xf32>
    %17 = tpu.concatenate %15, %16 in 0 : vector<1x16x32xf32>, vector<1x16x32xf32> -> vector<2x16x32xf32>
    %18 = vector.shape_cast %17 : vector<2x16x32xf32> to vector<2x512xf32>
    %c0_16 = arith.constant 0 : index
    %c0_17 = arith.constant 0 : index
    %c0_18 = arith.constant 0 : index
    %19 = vector.load %arg7[%c0_16, %c0_17, %c0_18] : memref<1x2x512xf32, #tpu.memory_space<vmem>>, vector<1x2x512xf32>
    %20 = vector.shape_cast %19 : vector<1x2x512xf32> to vector<2x512xf32>
    %21 = vector.shape_cast %18 : vector<2x512xf32> to vector<1x2x512xf32>
    tpu.vector_store %arg7[%c0_16, %c0_17, %c0_18], %21 {strides = array<i32>} : memref<1x2x512xf32, #tpu.memory_space<vmem>>, vector<1x2x512xf32>,
    return
  }
  func.func @transform_0(%arg0: i32, %arg1: i32) -> (i32, i32, i32, i32) {
    %c0_i32 = arith.constant 0 : i32
    %c0_i32_0 = arith.constant 0 : i32
    %c0_i32_1 = arith.constant 0 : i32
    %c0_i32_2 = arith.constant 0 : i32
    return %arg0, %c0_i32, %c0_i32_0, %c0_i32_1 : i32, i32, i32, i32
  }
  func.func @transform_1(%arg0: i32, %arg1: i32) -> (i32, i32) {
    %c0_i32 = arith.constant 0 : i32
    %c0_i32_0 = arith.constant 0 : i32
    return %arg1, %c0_i32 : i32, i32
  }
  func.func @transform_2(%arg0: i32, %arg1: i32) -> (i32, i32) {
    %c0_i32 = arith.constant 0 : i32
    %c0_i32_0 = arith.constant 0 : i32
    %c0_i32_1 = arith.constant 0 : i32
    return %c0_i32, %c0_i32_0 : i32, i32
  }
  func.func @transform_3(%arg0: i32, %arg1: i32) -> (i32, i32) {
    %c0_i32 = arith.constant 0 : i32
    %c0_i32_0 = arith.constant 0 : i32
    %c0_i32_1 = arith.constant 0 : i32
    return %c0_i32, %c0_i32_0 : i32, i32
  }
  func.func @transform_4(%arg0: i32, %arg1: i32) -> i32 {
    %c0_i32 = arith.constant 0 : i32
    %c0_i32_0 = arith.constant 0 : i32
    return %c0_i32 : i32
  }
  func.func @transform_5(%arg0: i32, %arg1: i32) -> (i32, i32, i32) {
    %c0_i32 = arith.constant 0 : i32
    %c0_i32_0 = arith.constant 0 : i32
    return %arg0, %c0_i32, %arg1 : i32, i32, i32
  }
}

</mosaic_0001>

<llo_original>
// kernel: tpu_custom_call.1
$region0: #{tpu_custom_call.1}
  #allocation0 [shape = 'u32[]', space=smem, size = 0x4, offset = 0x4, fixed_abs, tag = 'smem constant byte address 0x4 - core index']
  #allocation1 [shape = 'u32[144,128]{1,0:T(1,128)}', space=vmem, size = 0x12000, scoped, tag = 'internal scratch']
  #allocation2 [shape = 'f32[2,16,16]{2,1,0:T(8,128)}', space=vmem, size = 0x4000, scoped, tag = 'scratch operand']
  %s0 = inlined_call_operand.hbm [shape: f32[2,4,16,16], index: 0, kind: input, shape index: {}]
  %s1 = inlined_call_operand.vmem [shape: f32[32,16], index: 1, kind: input, shape index: {}]
  %s2 = inlined_call_operand.vmem [shape: f32[16,32], index: 2, kind: input, shape index: {}]
  %s3 = inlined_call_operand.vmem [shape: f32[2,4], index: 3, kind: input, shape index: {}]
  %s4 = inlined_call_operand.vmem [shape: f32[2], index: 4, kind: input, shape index: {}]
  %s5 = inlined_call_operand.hbm [shape: f32[2,2,1024], index: 5, kind: output, shape index: {}]
  %s6 = sld [smem:[#allocation0]]
  $region69: #{tpu_custom_call.1} parent=0
    _
  %s8 = ssub.s32 1, %s6
  %s9 = scalar_select 0, %s8, %s6
  $region1: #{tpu_custom_call.1} parent=0
    #allocation3 [shape = 'u8[65536]{0}', space=vmem, size = 0x10000, scoped, tag = 'input window, operand 0']
    #allocation4 [shape = 's32[2]{0}', space=sflag, size = 0x8, scoped, tag = 'scoped memory for tpu_custom_call.1']
    #allocation5 [shape = 's32[2]{0}', space=sflag, size = 0x8, scoped, tag = 'scoped memory for tpu_custom_call.1']
    #allocation6 [shape = 's32[2]{0}', space=sflag, size = 0x8, scoped, tag = 'scoped memory for tpu_custom_call.1']
    #allocation7 [shape = 'u8[1024]{0}', space=smem, size = 0x400, scoped, tag = 'input window, operand 3, single buffered']
    #allocation8 [shape = 'u8[512]{0}', space=smem, size = 0x200, scoped, tag = 'input window, operand 4, single buffered']
    #allocation9 [shape = 's32[1]{0}', space=sflag, size = 0x4, scoped, tag = 'scoped memory for tpu_custom_call.1']
    #allocation10 [shape = 'u8[8192]{0}', space=vmem, size = 0x2000, scoped, tag = 'output window, operand 0']
    %10 = vsyncpa [#allocation4], 0
    %s11 = scalar_lea.sflag [#allocation4], 1
    %12 = vsyncpa %s11, 0
    %13 = vsyncpa [#allocation6], 0
    %14 = vsyncpa [#allocation9], 0
    %15 = vsyncpa [#allocation5], 0
    %s16 = scalar_lea.sflag [#allocation5], 1
    %17 = vsyncpa %s16, 0
    loop: start=0, step=1, limit=6
    $region2: #{tpu_custom_call.1} parent=1 // loop_pre_header
      _
    $region3: #{tpu_custom_call.1} parent=1 // loop_header
      %s19 = sphi 0, %s23
      %p20 = scmp.ge.s32.totalorder %s19, 6
      %s26 = sphi 0, %s38
      %s27 = sphi 0, %s34
      %s28 = sphi 0, %s26
      %s29 = sphi 0, %s27
      %s30 = sphi 0, %s28
      %s31 = sphi 0, %s29
      %s41 = sphi 0, %s43
      %s44 = sphi 0, %s41
      %s45 = sphi 0, %s44
      %s61 = sphi 0, %s45
      %s67 = sphi 0, %s69
      %s70 = sphi 0, %s67
      %s71 = sphi 0, %s70
      %s87 = sphi 0, %s71
      %s91 = sphi 0, %s91
      %s93 = sphi 0, %s91
      %s94 = sphi 0, %s93
      %s108 = sphi 0, %s94
      %s112 = sphi 0, %s112
      %s114 = sphi 0, %s112
      %s115 = sphi 0, %s114
      %s129 = sphi 0, %s115
      %s133 = sphi 0, %s133
      %s135 = sphi 0, %s133
      %s136 = sphi 0, %s135
      %s150 = sphi 0, %s136
      %s158 = sphi 0, %s160
      %s161 = sphi 0, %s158
      %s162 = sphi 0, %s161
      %s178 = sphi 0, %s162
    $region4: #{tpu_custom_call.1} parent=1 // loop_header_branch
      %22 = sbr.rel (%p20) target = $region8
    $region5: #{tpu_custom_call.1} parent=1 // loop_body
      %s24 = ssub.s32 %s19, 1
      %s25 = ssub.s32 %s19, 2
      %s32 = sadd.s32 1, %s27
      %p33 = scmp.ge.s32.totalorder %s32, 2
      %s34 = scalar_select %p33, 0, %s32
      %s35 = sadd.s32 1, %s26
      %s36 = scalar_select %p33, %s35, %s26
      %p37 = scmp.ge.s32.totalorder %s36, 2
      %s38 = scalar_select %p37, 0, %s36
      %s39 = ssub.s32 %s26, %s38
      %p40 = scmp.eq.s32.totalorder %s39, 0
      %s42 = sadd.s32 %s41, 1
      %s43 = scalar_select %p40, %s41, %s42
      %p46 = pneg %p40
      %p47 = scmp.eq.s32.totalorder %s19, 3
      %p48 = por %p46, %p47
      %p49 = scmp.ne.s32.totalorder %s41, %s44
      %p50 = scmp.eq.s32.totalorder %s19, 0
      %p51 = por %p49, %p50
      %p52 = scmp.ne.s32.totalorder %s41, %s44
      %p53 = scmp.eq.s32.totalorder %s24, 3
      %p54 = por %p52, %p53
      %p55 = scmp.ne.s32.totalorder %s44, %s45
      %p56 = scmp.eq.s32.totalorder %s24, 0
      %p57 = por %p55, %p56
      %p58 = scmp.ne.s32.totalorder %s44, %s45
      %p59 = scmp.eq.s32.totalorder %s25, 3
      %p60 = por %p58, %p59
      %p62 = scmp.ne.s32.totalorder %s45, %s61
      %p63 = scmp.eq.s32.totalorder %s25, 0
      %p64 = por %p62, %p63
      %s65 = ssub.s32 %s27, %s34
      %p66 = scmp.eq.s32.totalorder %s65, 0
      %s68 = sadd.s32 %s67, 1
      %s69 = scalar_select %p66, %s67, %s68
      %p72 = pneg %p66
      %p73 = scmp.eq.s32.totalorder %s19, 3
      %p74 = por %p72, %p73
      %p75 = scmp.ne.s32.totalorder %s67, %s70
      %p76 = scmp.eq.s32.totalorder %s19, 0
      %p77 = por %p75, %p76
      %p78 = scmp.ne.s32.totalorder %s67, %s70
      %p79 = scmp.eq.s32.totalorder %s24, 3
      %p80 = por %p78, %p79
      %p81 = scmp.ne.s32.totalorder %s70, %s71
      %p82 = scmp.eq.s32.totalorder %s24, 0
      %p83 = por %p81, %p82
      %p84 = scmp.ne.s32.totalorder %s70, %s71
      %p85 = scmp.eq.s32.totalorder %s25, 3
      %p86 = por %p84, %p85
      %p88 = scmp.ne.s32.totalorder %s71, %s87
      %p89 = scmp.eq.s32.totalorder %s25, 0
      %p90 = por %p88, %p89
      %s92 = sadd.s32 %s91, 1
      %p95 = scmp.eq.s32.totalorder %s19, 3
      %p96 = scmp.ne.s32.totalorder %s91, %s93
      %p97 = scmp.eq.s32.totalorder %s19, 0
      %p98 = por %p96, %p97
      %p99 = scmp.ne.s32.totalorder %s91, %s93
      %p100 = scmp.eq.s32.totalorder %s24, 3
      %p101 = por %p99, %p100
      %p102 = scmp.ne.s32.totalorder %s93, %s94
      %p103 = scmp.eq.s32.totalorder %s24, 0
      %p104 = por %p102, %p103
      %p105 = scmp.ne.s32.totalorder %s93, %s94
      %p106 = scmp.eq.s32.totalorder %s25, 3
      %p107 = por %p105, %p106
      %p109 = scmp.ne.s32.totalorder %s94, %s108
      %p110 = scmp.eq.s32.totalorder %s25, 0
      %p111 = por %p109, %p110
      %s113 = sadd.s32 %s112, 1
      %p116 = scmp.eq.s32.totalorder %s19, 3
      %p117 = scmp.ne.s32.totalorder %s112, %s114
      %p118 = scmp.eq.s32.totalorder %s19, 0
      %p119 = por %p117, %p118
      %p120 = scmp.ne.s32.totalorder %s112, %s114
      %p121 = scmp.eq.s32.totalorder %s24, 3
      %p122 = por %p120, %p121
      %p123 = scmp.ne.s32.totalorder %s114, %s115
      %p124 = scmp.eq.s32.totalorder %s24, 0
      %p125 = por %p123, %p124
      %p126 = scmp.ne.s32.totalorder %s114, %s115
      %p127 = scmp.eq.s32.totalorder %s25, 3
      %p128 = por %p126, %p127
      %p130 = scmp.ne.s32.totalorder %s115, %s129
      %p131 = scmp.eq.s32.totalorder %s25, 0
      %p132 = por %p130, %p131
      %s134 = sadd.s32 %s133, 1
      %p137 = scmp.eq.s32.totalorder %s19, 3
      %p138 = scmp.ne.s32.totalorder %s133, %s135
      %p139 = scmp.eq.s32.totalorder %s19, 0
      %p140 = por %p138, %p139
      %p141 = scmp.ne.s32.totalorder %s133, %s135
      %p142 = scmp.eq.s32.totalorder %s24, 3
      %p143 = por %p141, %p142
      %p144 = scmp.ne.s32.totalorder %s135, %s136
      %p145 = scmp.eq.s32.totalorder %s24, 0
      %p146 = por %p144, %p145
      %p147 = scmp.ne.s32.totalorder %s135, %s136
      %p148 = scmp.eq.s32.totalorder %s25, 3
      %p149 = por %p147, %p148
      %p151 = scmp.ne.s32.totalorder %s136, %s150
      %p152 = scmp.eq.s32.totalorder %s25, 0
      %p153 = por %p151, %p152
      %s154 = ssub.s32 %s26, %s38
      %s155 = ssub.s32 %s27, %s34
      %s156 = sor.u32 %s154, %s155
      %p157 = scmp.eq.s32.totalorder %s156, 0
      %s159 = sadd.s32 %s158, 1
      %s160 = scalar_select %p157, %s158, %s159
      %p163 = pneg %p157
      %p164 = scmp.eq.s32.totalorder %s19, 3
      %p165 = por %p163, %p164
      %p166 = scmp.ne.s32.totalorder %s158, %s161
      %p167 = scmp.eq.s32.totalorder %s19, 0
      %p168 = por %p166, %p167
      %p169 = scmp.ne.s32.totalorder %s158, %s161
      %p170 = scmp.eq.s32.totalorder %s24, 3
      %p171 = por %p169, %p170
      %p172 = scmp.ne.s32.totalorder %s161, %s162
      %p173 = scmp.eq.s32.totalorder %s24, 0
      %p174 = por %p172, %p173
      %p175 = scmp.ne.s32.totalorder %s161, %s162
      %p176 = scmp.eq.s32.totalorder %s25, 3
      %p177 = por %p175, %p176
      %p179 = scmp.ne.s32.totalorder %s162, %s178
      %p180 = scmp.eq.s32.totalorder %s25, 0
      %p181 = por %p179, %p180
      %p182 = scmp.le.s32.totalorder 1, %s19
      %p183 = scmp.lt.s32.totalorder %s19, 5
      %p184 = pnand %p182, %p183
      %p185 = pneg %p184
      // Predicated region
      $region9: #{tpu_custom_call.1} parent=5 // pred_check
        _
      $region10: #{tpu_custom_call.1} parent=5 // pred_check_branch
        %187 = sbr.rel (%p184) target = $region12
      $region11: #{tpu_custom_call.1} parent=5 // pred_region
        %s188 = ssub.s32 %s19, 1
        // Predicated region
        $region13: #{tpu_custom_call.1} parent=11 // pred_check
          %p189 = pneg %p104
        $region14: #{tpu_custom_call.1} parent=11 // pred_check_branch
          %191 = sbr.rel (%p189) target = $region16
        $region15: #{tpu_custom_call.1} parent=11 // pred_region
          _
        $region16: #{tpu_custom_call.1} parent=11 // pred_fallthru
          _
        // Predicated region
        $region17: #{tpu_custom_call.1} parent=11 // pred_check
          %p192 = pneg %p125
        $region18: #{tpu_custom_call.1} parent=11 // pred_check_branch
          %194 = sbr.rel (%p192) target = $region20
        $region19: #{tpu_custom_call.1} parent=11 // pred_region
          %s196 = ssub.s32 32, 32
          %197 = vsyncadd [#allocation6], %s196
          %s199 = sshll.u32 %s3, 4
          %s200 = int_to_ptr.vmem [resolvable:$true] %s199
          %202 = dma.vmem_to_smem %s200, 32, [#allocation7], [#allocation6]
        $region20: #{tpu_custom_call.1} parent=11 // pred_fallthru
          _
        // Predicated region
        $region21: #{tpu_custom_call.1} parent=11 // pred_check
          %p203 = pneg %p146
        $region22: #{tpu_custom_call.1} parent=11 // pred_check_branch
          %205 = sbr.rel (%p203) target = $region24
        $region23: #{tpu_custom_call.1} parent=11 // pred_region
          %s207 = ssub.s32 16, 16
          %208 = vsyncadd [#allocation9], %s207
          %s210 = sshll.u32 %s4, 4
          %s211 = int_to_ptr.vmem [resolvable:$true] %s210
          %213 = dma.vmem_to_smem %s211, 16, [#allocation8], [#allocation9]
        $region24: #{tpu_custom_call.1} parent=11 // pred_fallthru
          _
      $region12: #{tpu_custom_call.1} parent=5 // pred_fallthru
        _
      %p214 = scmp.lt.s32.totalorder %s19, 4
      // Predicated region
      $region25: #{tpu_custom_call.1} parent=5 // pred_check
        %p215 = pneg %p214
      $region26: #{tpu_custom_call.1} parent=5 // pred_check_branch
        %217 = sbr.rel (%p215) target = $region28
      $region27: #{tpu_custom_call.1} parent=5 // pred_region
        // Predicated region
        $region29: #{tpu_custom_call.1} parent=27 // pred_check
          %p218 = pneg %p51
        $region30: #{tpu_custom_call.1} parent=27 // pred_check_branch
          %220 = sbr.rel (%p218) target = $region32
        $region31: #{tpu_custom_call.1} parent=27 // pred_region
          %s221 = sand.u32 %s41, 1
          %s222 = scalar_lea.sflag [#allocation4], %s221
          %s223 = sand.u32 %s41, 1
          %s224 = smul.addr %s223, 64
          %s225 = scalar_lea.vmem [#allocation3], %s224
          %s227 = ssub.s32 1024, 1024
          %228 = vsyncadd %s222, %s227
          %s229 = smul.addr %s26, 8
          %s230 = smul.addr %s229, 128
          %s231 = scalar_lea.hbm %s0, %s230
          %s232 = sshll.u32 %s225, 4
          %s233 = int_to_ptr.vmem [resolvable:$true] %s232
          %238 = dma.hbm_to_vmem [thread:$0]  %s231, 1024, %s233, %s222, 128, 128, 8
        $region32: #{tpu_custom_call.1} parent=27 // pred_fallthru
          _
        // Predicated region
        $region33: #{tpu_custom_call.1} parent=27 // pred_check
          %p239 = pneg %p77
        $region34: #{tpu_custom_call.1} parent=27 // pred_check_branch
          %241 = sbr.rel (%p239) target = $region36
        $region35: #{tpu_custom_call.1} parent=27 // pred_region
          %s242 = smul.u32 2, %s27
          %p243 = scmp.lt.s32.totalorder %s242, 3
          %s244 = scalar_select %p243, %s242, 3
          %s245 = smul.addr %s244, 8
          %s246 = scalar_lea.vmem %s1, %s245
          %s247 = smul.u32 2, %s27
        $region36: #{tpu_custom_call.1} parent=27 // pred_fallthru
          _
      $region28: #{tpu_custom_call.1} parent=5 // pred_fallthru
        _
      %p248 = scmp.le.s32.totalorder 1, %s19
      %p249 = scmp.lt.s32.totalorder %s19, 5
      %p250 = pnand %p248, %p249
      %p251 = pneg %p250
      // Predicated region
      $region37: #{tpu_custom_call.1} parent=5 // pred_check
        _
      $region38: #{tpu_custom_call.1} parent=5 // pred_check_branch
        %253 = sbr.rel (%p250) target = $region40
      $region39: #{tpu_custom_call.1} parent=5 // pred_region
        %s254 = ssub.s32 %s19, 1
        %s255 = sand.u32 %s44, 1
        %s256 = scalar_lea.sflag [#allocation4], %s255
        %s257 = sand.u32 %s44, 1
        %s258 = smul.addr %s257, 64
        %s259 = scalar_lea.vmem [#allocation3], %s258
        // Predicated region
        $region41: #{tpu_custom_call.1} parent=39 // pred_check
          %p260 = pneg %p57
        $region42: #{tpu_custom_call.1} parent=39 // pred_check_branch
          %262 = sbr.rel (%p260) target = $region44
        $region43: #{tpu_custom_call.1} parent=39 // pred_region
          %263 = dma.done %s256, 1024
        $region44: #{tpu_custom_call.1} parent=39 // pred_fallthru
          _
        // Predicated region
        $region45: #{tpu_custom_call.1} parent=39 // pred_check
          %p264 = pneg %p125
        $region46: #{tpu_custom_call.1} parent=39 // pred_check_branch
          %266 = sbr.rel (%p264) target = $region48
        $region47: #{tpu_custom_call.1} parent=39 // pred_region
          %267 = dma.done [#allocation6], 32
        $region48: #{tpu_custom_call.1} parent=39 // pred_fallthru
          _
        // Predicated region
        $region49: #{tpu_custom_call.1} parent=39 // pred_check
          %p268 = pneg %p146
        $region50: #{tpu_custom_call.1} parent=39 // pred_check_branch
          %270 = sbr.rel (%p268) target = $region52
        $region51: #{tpu_custom_call.1} parent=39 // pred_region
          %271 = dma.done [#allocation9], 16
        $region52: #{tpu_custom_call.1} parent=39 // pred_fallthru
          _
        %272 = sfence
        %s273 = sand.u32 %s44, 1
        %s274 = scalar_lea.sflag [#allocation4], %s273
        %s275 = sand.u32 %s44, 1
        %s276 = smul.addr %s275, 64
        %s277 = scalar_lea.vmem [#allocation3], %s276
        %p278 = pneg %p57
        %p279 = pneg %p54
        %s280 = smul.u32 2, %s29
        %p281 = scmp.lt.s32.totalorder %s280, 3
        %s282 = scalar_select %p281, %s280, 3
        %s283 = smul.addr %s282, 8
        %s284 = scalar_lea.vmem %s1, %s283
        %p285 = pneg %p83
        %p286 = pneg %p80
        %p287 = pneg %p104
        %p288 = pneg %p101
        %p289 = pneg %p125
        %p290 = pneg %p122
        %p291 = pneg %p146
        %p292 = pneg %p143
        %p293 = pneg %p174
        %p294 = pneg %p171
        %s295 = sand.u32 %s161, 1
        %s296 = scalar_lea.sflag [#allocation5], %s295
        %s297 = sand.u32 %s161, 1
        %s298 = smul.addr %s297, 8
        %s299 = scalar_lea.vmem [#allocation10], %s298
        %s300 = smul.u32 2, %s29
        %p301 = scmp.lt.s32.totalorder %s300, 3
        %s302 = scalar_select %p301, %s300, 3
        %s303 = smul.addr %s302, 8
        %s304 = scalar_lea.vmem %s1, %s303
        %s305 = smul.u32 2, %s29
        %s306 = smul.u32 4, %s29
        %p307 = scmp.eq.s32.totalorder %s29, 0
        // Predicated region
        $region53: #{tpu_custom_call.1} parent=39 // pred_check
          %p308 = pneg %p307
        $region54: #{tpu_custom_call.1} parent=39 // pred_check_branch
          %310 = sbr.rel (%p308) target = $region56
        $region55: #{tpu_custom_call.1} parent=39 // pred_region
          %s311 = sld [smem:[#allocation7]]
          %v312 = vld [vmem:[%s259] sm:$0xff]
          %v313 = vld [vmem:[%s259 + $0x8] sm:$0xff]
          %v314 = vstv %s311
          %v315 = vmul.f32 %v314, %v312
          %v316 = vmul.f32 %v314, %v313
          %s317 = sld [smem:[#allocation7 + $0x1]]
          %s318 = scalar_lea.vmem %s259, 16 [#allocation3]
          %v319 = vld [vmem:[%s318] sm:$0xff]
          %v320 = vld [vmem:[%s318 + $0x8] sm:$0xff]
          %v321 = vstv %s317
          %v322 = vmul.f32 %v321, %v319
          %v323 = vmul.f32 %v321, %v320
          %v324 = vadd.f32 %v315, %v322
          %v325 = vadd.f32 %v316, %v323
          %s326 = sld [smem:[#allocation7 + $0x2]]
          %s327 = scalar_lea.vmem %s259, 32 [#allocation3]
          %v328 = vld [vmem:[%s327] sm:$0xff]
          %v329 = vld [vmem:[%s327 + $0x8] sm:$0xff]
          %v330 = vstv %s326
          %v331 = vmul.f32 %v330, %v328
          %v332 = vmul.f32 %v330, %v329
          %v333 = vadd.f32 %v324, %v331
          %v334 = vadd.f32 %v325, %v332
          %s335 = sld [smem:[#allocation7 + $0x3]]
          %s336 = scalar_lea.vmem %s259, 48 [#allocation3]
          %v337 = vld [vmem:[%s336] sm:$0xff]
          %v338 = vld [vmem:[%s336 + $0x8] sm:$0xff]
          %v339 = vstv %s335
          %v340 = vmul.f32 %v339, %v337
          %v341 = vmul.f32 %v339, %v338
          %v342 = vadd.f32 %v333, %v340
          %v343 = vadd.f32 %v334, %v341
          %s344 = sld [smem:[#allocation8]]
          %v345 = vstv %s344
          %v346 = vadd.f32 %v342, %v345
          %v347 = vadd.f32 %v343, %v345
          %vm348 = vcmask 130048
          %349 = vst.msk [vmem:[#allocation2] sm:$0xff] %vm348, %v346
          %350 = vst.msk [vmem:[#allocation2 + $0x8] sm:$0xff] %vm348, %v347
          %s351 = sld [smem:[#allocation7 + $0x80]]
          %v352 = vld [vmem:[%s259] sm:$0xff]
          %v353 = vld [vmem:[%s259 + $0x8] sm:$0xff]
          %v354 = vstv %s351
          %v355 = vmul.f32 %v354, %v352
          %v356 = vmul.f32 %v354, %v353
          %s357 = sld [smem:[#allocation7 + $0x81]]
          %v358 = vld [vmem:[%s318] sm:$0xff]
          %v359 = vld [vmem:[%s318 + $0x8] sm:$0xff]
          %v360 = vstv %s357
          %v361 = vmul.f32 %v360, %v358
          %v362 = vmul.f32 %v360, %v359
          %v363 = vadd.f32 %v355, %v361
          %v364 = vadd.f32 %v356, %v362
          %s365 = sld [smem:[#allocation7 + $0x82]]
          %v366 = vld [vmem:[%s327] sm:$0xff]
          %v367 = vld [vmem:[%s327 + $0x8] sm:$0xff]
          %v368 = vstv %s365
          %v369 = vmul.f32 %v368, %v366
          %v370 = vmul.f32 %v368, %v367
          %v371 = vadd.f32 %v363, %v369
          %v372 = vadd.f32 %v364, %v370
          %s373 = sld [smem:[#allocation7 + $0x83]]
          %v374 = vld [vmem:[%s336] sm:$0xff]
          %v375 = vld [vmem:[%s336 + $0x8] sm:$0xff]
          %v376 = vstv %s373
          %v377 = vmul.f32 %v376, %v374
          %v378 = vmul.f32 %v376, %v375
          %v379 = vadd.f32 %v371, %v377
          %v380 = vadd.f32 %v372, %v378
          %s381 = sld [smem:[#allocation8 + $0x1]]
          %v382 = vstv %s381
          %v383 = vadd.f32 %v379, %v382
          %v384 = vadd.f32 %v380, %v382
          %s385 = scalar_lea.vmem [#allocation2], 16
          %386 = vst.msk [vmem:[%s385] sm:$0xff] %vm348, %v383
          %387 = vst.msk [vmem:[%s385 + $0x8] sm:$0xff] %vm348, %v384
        $region56: #{tpu_custom_call.1} parent=39 // pred_fallthru
          _
        %v388 = vld [vmem:[%s304] sm:$0xff]
        %v389 = vld [vmem:[%s304 + $0x8] sm:$0xff]
        %v390 = vld [vmem:[#allocation2] sm:$0xff]
        %v391 = vld [vmem:[#allocation2 + $0x8] sm:$0xff]
        %vm392 = vcmask 130048
        %v394 = vsel %vm392, %v388, 0
        %v397 = vsel %vm392, %v389, 0
        %399 = vmatprep.subr.mxu0 0.0
        %v400 = vand.u32 %v390, 4294901760
        %401 = vmatpush1.msra.mxu0 %v400
        %402 = vmatprep.subr.mxu0 0.0
        %v403 = vand.u32 %v391, 4294901760
        %404 = vmatpush1.msra.mxu0 %v403
        %405 = vmatprep.subr.mxu0 0.0
        %406 = vmatpush1.msra.mxu0 0.0
        %407 = vmatprep.subr.mxu0 0.0
        %408 = vmatpush1.msra.mxu0 0.0
        %409 = vmatprep.subr.mxu0 0.0
        %410 = vmatpush1.msra.mxu0 0.0
        %411 = vmatprep.subr.mxu0 0.0
        %412 = vmatpush1.msra.mxu0 0.0
        %413 = vmatprep.subr.mxu0 0.0
        %414 = vmatpush1.msra.mxu0 0.0
        %415 = vmatprep.subr.mxu0 0.0
        %416 = vmatpush1.msra.mxu0 0.0
        %417 = vmatprep.subr.mxu0 0.0
        %418 = vmatpush1.msra.mxu0 0.0
        %419 = vmatprep.subr.mxu0 0.0
        %420 = vmatpush1.msra.mxu0 0.0
        %421 = vmatprep.subr.mxu0 0.0
        %422 = vmatpush1.msra.mxu0 0.0
        %423 = vmatprep.subr.mxu0 0.0
        %424 = vmatpush1.msra.mxu0 0.0
        %425 = vmatprep.subr.mxu0 0.0
        %426 = vmatpush1.msra.mxu0 0.0
        %427 = vmatprep.subr.mxu0 0.0
        %428 = vmatpush1.msra.mxu0 0.0
        %429 = vmatprep.subr.mxu0 0.0
        %430 = vmatpush1.msra.mxu0 0.0
        %431 = vmatprep.subr.mxu0 0.0
        %432 = vmatpush1.msra.mxu0 0.0
        %433 = vmatprep.subr.mxu0 0.0
        %434 = vmatpush1.msra.mxu0 0.0
        %435 = vmatprep.subr.mxu0 0.0
        %436 = vmatpush1.msra.mxu0 0.0
        %437 = vmatprep.subr.mxu0 0.0
        %438 = vmatpush1.msra.mxu0 0.0
        %439 = vmatprep.subr.mxu0 0.0
        %440 = vmatpush1.msra.mxu0 0.0
        %441 = vmatprep.subr.mxu0 0.0
        %442 = vmatpush1.msra.mxu0 0.0
        %443 = vmatprep.subr.mxu0 0.0
        %444 = vmatpush1.msra.mxu0 0.0
        %445 = vmatprep.subr.mxu0 0.0
        %446 = vmatpush1.msra.mxu0 0.0
        %447 = vmatprep.subr.mxu0 0.0
        %448 = vmatpush1.msra.mxu0 0.0
        %449 = vmatprep.subr.mxu0 0.0
        %450 = vmatpush1.msra.mxu0 0.0
        %451 = vmatprep.subr.mxu0 0.0
        %452 = vmatpush1.msra.mxu0 0.0
        %453 = vmatprep.subr.mxu0 0.0
        %454 = vmatpush1.msra.mxu0 0.0
        %455 = vmatprep.subr.mxu0 0.0
        %456 = vmatpush1.msra.mxu0 0.0
        %457 = vmatprep.subr.mxu0 0.0
        %458 = vmatpush1.msra.mxu0 0.0
        %459 = vmatprep.subr.mxu0 0.0
        %460 = vmatpush1.msra.mxu0 0.0
        %461 = vmatprep.subr.mxu0 0.0
        %462 = vmatpush1.msra.mxu0 0.0
        %463 = vmatprep.subr.mxu0 0.0
        %464 = vmatpush1.msra.mxu0 0.0
        %465 = vmatprep.mubr.f32.mxu0 0.0
        %v466 = vand.u32 %v394, 4294901760
        %v467 = vsub.f32 %v394, %v466
        %v468 = vand.u32 %v467, 4294901760
        %v469 = vsub.f32 %v467, %v468
        %v470 = vand.u32 %v469, 4294901760
        %471 = vmatmul.mubr.f32.gmra.mrb[0].mxu0 %v470
        %v472 = vpop.f32.mrb[0].mxu0
        %v473 = vadd.f32 0.0, %v472
        %v474 = vpop.f32.mrb[0].mxu0
        %475 = vmatprep.mubr.f32.mxu0 0.0
        %v476 = vand.u32 %v397, 4294901760
        %v477 = vsub.f32 %v397, %v476
        %v478 = vand.u32 %v477, 4294901760
        %v479 = vsub.f32 %v477, %v478
        %v480 = vand.u32 %v479, 4294901760
        %481 = vmatmul.mubr.f32.gmra.mrb[0].mxu0 %v480
        %v482 = vpop.f32.mrb[0].mxu0
        %v483 = vadd.f32 0.0, %v482
        %v484 = vpop.f32.mrb[0].mxu0
        %485 = vdwg.mxu0
        %486 = vmatprep.subr.mxu0 0.0
        %v487 = vand.u32 %v390, 4294901760
        %v488 = vsub.f32 %v390, %v487
        %v489 = vand.u32 %v488, 4294901760
        %v490 = vsub.f32 %v488, %v489
        %v491 = vand.u32 %v490, 4294901760
        %492 = vmatpush1.msra.mxu0 %v491
        %493 = vmatprep.subr.mxu0 0.0
        %v494 = vand.u32 %v391, 4294901760
        %v495 = vsub.f32 %v391, %v494
        %v496 = vand.u32 %v495, 4294901760
        %v497 = vsub.f32 %v495, %v496
        %v498 = vand.u32 %v497, 4294901760
        %499 = vmatpush1.msra.mxu0 %v498
        %500 = vmatprep.subr.mxu0 0.0
        %501 = vmatpush1.msra.mxu0 0.0
        %502 = vmatprep.subr.mxu0 0.0
        %503 = vmatpush1.msra.mxu0 0.0
        %504 = vmatprep.subr.mxu0 0.0
        %505 = vmatpush1.msra.mxu0 0.0
        %506 = vmatprep.subr.mxu0 0.0
        %507 = vmatpush1.msra.mxu0 0.0
        %508 = vmatprep.subr.mxu0 0.0
        %509 = vmatpush1.msra.mxu0 0.0
        %510 = vmatprep.subr.mxu0 0.0
        %511 = vmatpush1.msra.mxu0 0.0
        %512 = vmatprep.subr.mxu0 0.0
        %513 = vmatpush1.msra.mxu0 0.0
        %514 = vmatprep.subr.mxu0 0.0
        %515 = vmatpush1.msra.mxu0 0.0
        %516 = vmatprep.subr.mxu0 0.0
        %517 = vmatpush1.msra.mxu0 0.0
        %518 = vmatprep.subr.mxu0 0.0
        %519 = vmatpush1.msra.mxu0 0.0
        %520 = vmatprep.subr.mxu0 0.0
        %521 = vmatpush1.msra.mxu0 0.0
        %522 = vmatprep.subr.mxu0 0.0
        %523 = vmatpush1.msra.mxu0 0.0
        %524 = vmatprep.subr.mxu0 0.0
        %525 = vmatpush1.msra.mxu0 0.0
        %526 = vmatprep.subr.mxu0 0.0
        %527 = vmatpush1.msra.mxu0 0.0
        %528 = vmatprep.subr.mxu0 0.0
        %529 = vmatpush1.msra.mxu0 0.0
        %530 = vmatprep.subr.mxu0 0.0
        %531 = vmatpush1.msra.mxu0 0.0
        %532 = vmatprep.subr.mxu0 0.0
        %533 = vmatpush1.msra.mxu0 0.0
        %534 = vmatprep.subr.mxu0 0.0
        %535 = vmatpush1.msra.mxu0 0.0
        %536 = vmatprep.subr.mxu0 0.0
        %537 = vmatpush1.msra.mxu0 0.0
        %538 = vmatprep.subr.mxu0 0.0
        %539 = vmatpush1.msra.mxu0 0.0
        %540 = vmatprep.subr.mxu0 0.0
        %541 = vmatpush1.msra.mxu0 0.0
        %542 = vmatprep.subr.mxu0 0.0
        %543 = vmatpush1.msra.mxu0 0.0
        %544 = vmatprep.subr.mxu0 0.0
        %545 = vmatpush1.msra.mxu0 0.0
        %546 = vmatprep.subr.mxu0 0.0
        %547 = vmatpush1.msra.mxu0 0.0
        %548 = vmatprep.subr.mxu0 0.0
        %549 = vmatpush1.msra.mxu0 0.0
        %550 = vmatprep.subr.mxu0 0.0
        %551 = vmatpush1.msra.mxu0 0.0
        %552 = vmatprep.subr.mxu0 0.0
        %553 = vmatpush1.msra.mxu0 0.0
        %554 = vmatprep.subr.mxu0 0.0
        %555 = vmatpush1.msra.mxu0 0.0
        %556 = vmatprep.subr.mxu0 0.0
        %557 = vmatpush1.msra.mxu0 0.0
        %558 = vmatprep.subr.mxu0 0.0
        %559 = vmatpush1.msra.mxu0 0.0
        %560 = vmatprep.mubr.f32.mxu0 0.0
        %v561 = vand.u32 %v394, 4294901760
        %562 = vmatmul.mubr.f32.gmra.mrb[0].mxu0 %v561
        %v563 = vpop.f32.mrb[0].mxu0
        %v564 = vadd.f32 %v473, %v563
        %v565 = vpop.f32.mrb[0].mxu0
        %566 = vmatprep.mubr.f32.mxu0 0.0
        %v567 = vand.u32 %v397, 4294901760
        %568 = vmatmul.mubr.f32.gmra.mrb[0].mxu0 %v567
        %v569 = vpop.f32.mrb[0].mxu0
        %v570 = vadd.f32 %v483, %v569
        %v571 = vpop.f32.mrb[0].mxu0
        %572 = vdwg.mxu0
        %573 = vmatprep.subr.mxu0 0.0
        %v574 = vand.u32 %v390, 4294901760
        %v575 = vsub.f32 %v390, %v574
        %576 = vmatpush1.msra.mxu0 %v575
        %577 = vmatprep.subr.mxu0 0.0
        %v578 = vand.u32 %v391, 4294901760
        %v579 = vsub.f32 %v391, %v578
        %580 = vmatpush1.msra.mxu0 %v579
        %581 = vmatprep.subr.mxu0 0.0
        %582 = vmatpush1.msra.mxu0 0.0
        %583 = vmatprep.subr.mxu0 0.0
        %584 = vmatpush1.msra.mxu0 0.0
        %585 = vmatprep.subr.mxu0 0.0
        %586 = vmatpush1.msra.mxu0 0.0
        %587 = vmatprep.subr.mxu0 0.0
        %588 = vmatpush1.msra.mxu0 0.0
        %589 = vmatprep.subr.mxu0 0.0
        %590 = vmatpush1.msra.mxu0 0.0
        %591 = vmatprep.subr.mxu0 0.0
        %592 = vmatpush1.msra.mxu0 0.0
        %593 = vmatprep.subr.mxu0 0.0
        %594 = vmatpush1.msra.mxu0 0.0
        %595 = vmatprep.subr.mxu0 0.0
        %596 = vmatpush1.msra.mxu0 0.0
        %597 = vmatprep.subr.mxu0 0.0
        %598 = vmatpush1.msra.mxu0 0.0
        %599 = vmatprep.subr.mxu0 0.0
        %600 = vmatpush1.msra.mxu0 0.0
        %601 = vmatprep.subr.mxu0 0.0
        %602 = vmatpush1.msra.mxu0 0.0
        %603 = vmatprep.subr.mxu0 0.0
        %604 = vmatpush1.msra.mxu0 0.0
        %605 = vmatprep.subr.mxu0 0.0
        %606 = vmatpush1.msra.mxu0 0.0
        %607 = vmatprep.subr.mxu0 0.0
        %608 = vmatpush1.msra.mxu0 0.0
        %609 = vmatprep.subr.mxu0 0.0
        %610 = vmatpush1.msra.mxu0 0.0
        %611 = vmatprep.subr.mxu0 0.0
        %612 = vmatpush1.msra.mxu0 0.0
        %613 = vmatprep.subr.mxu0 0.0
        %614 = vmatpush1.msra.mxu0 0.0
        %615 = vmatprep.subr.mxu0 0.0
        %616 = vmatpush1.msra.mxu0 0.0
        %617 = vmatprep.subr.mxu0 0.0
        %618 = vmatpush1.msra.mxu0 0.0
        %619 = vmatprep.subr.mxu0 0.0
        %620 = vmatpush1.msra.mxu0 0.0
        %621 = vmatprep.subr.mxu0 0.0
        %622 = vmatpush1.msra.mxu0 0.0
        %623 = vmatprep.subr.mxu0 0.0
        %624 = vmatpush1.msra.mxu0 0.0
        %625 = vmatprep.subr.mxu0 0.0
        %626 = vmatpush1.msra.mxu0 0.0
        %627 = vmatprep.subr.mxu0 0.0
        %628 = vmatpush1.msra.mxu0 0.0
        %629 = vmatprep.subr.mxu0 0.0
        %630 = vmatpush1.msra.mxu0 0.0
        %631 = vmatprep.subr.mxu0 0.0
        %632 = vmatpush1.msra.mxu0 0.0
        %633 = vmatprep.subr.mxu0 0.0
        %634 = vmatpush1.msra.mxu0 0.0
        %635 = vmatprep.subr.mxu0 0.0
        %636 = vmatpush1.msra.mxu0 0.0
        %637 = vmatprep.subr.mxu0 0.0
        %638 = vmatpush1.msra.mxu0 0.0
        %639 = vmatprep.subr.mxu0 0.0
        %640 = vmatpush1.msra.mxu0 0.0
        %641 = vmatprep.mubr.f32.mxu0 0.0
        %v642 = vand.u32 %v394, 4294901760
        %v643 = vsub.f32 %v394, %v642
        %644 = vmatmul.mubr.f32.gmra.mrb[0].mxu0 %v643
        %v645 = vpop.f32.mrb[0].mxu0
        %v646 = vadd.f32 %v564, %v645
        %v647 = vpop.f32.mrb[0].mxu0
        %648 = vmatprep.mubr.f32.mxu0 0.0
        %v649 = vand.u32 %v397, 4294901760
        %v650 = vsub.f32 %v397, %v649
        %651 = vmatmul.mubr.f32.gmra.mrb[0].mxu0 %v650
        %v652 = vpop.f32.mrb[0].mxu0
        %v653 = vadd.f32 %v570, %v652
        %v654 = vpop.f32.mrb[0].mxu0
        %655 = vdwg.mxu0
        %656 = vmatprep.subr.mxu0 0.0
        %v657 = vand.u32 %v390, 4294901760
        %658 = vmatpush1.msra.mxu0 %v657
        %659 = vmatprep.subr.mxu0 0.0
        %v660 = vand.u32 %v391, 4294901760
        %661 = vmatpush1.msra.mxu0 %v660
        %662 = vmatprep.subr.mxu0 0.0
        %663 = vmatpush1.msra.mxu0 0.0
        %664 = vmatprep.subr.mxu0 0.0
        %665 = vmatpush1.msra.mxu0 0.0
        %666 = vmatprep.subr.mxu0 0.0
        %667 = vmatpush1.msra.mxu0 0.0
        %668 = vmatprep.subr.mxu0 0.0
        %669 = vmatpush1.msra.mxu0 0.0
        %670 = vmatprep.subr.mxu0 0.0
        %671 = vmatpush1.msra.mxu0 0.0
        %672 = vmatprep.subr.mxu0 0.0
        %673 = vmatpush1.msra.mxu0 0.0
        %674 = vmatprep.subr.mxu0 0.0
        %675 = vmatpush1.msra.mxu0 0.0
        %676 = vmatprep.subr.mxu0 0.0
        %677 = vmatpush1.msra.mxu0 0.0
        %678 = vmatprep.subr.mxu0 0.0
        %679 = vmatpush1.msra.mxu0 0.0
        %680 = vmatprep.subr.mxu0 0.0
        %681 = vmatpush1.msra.mxu0 0.0
        %682 = vmatprep.subr.mxu0 0.0
        %683 = vmatpush1.msra.mxu0 0.0
        %684 = vmatprep.subr.mxu0 0.0
        %685 = vmatpush1.msra.mxu0 0.0
        %686 = vmatprep.subr.mxu0 0.0
        %687 = vmatpush1.msra.mxu0 0.0
        %688 = vmatprep.subr.mxu0 0.0
        %689 = vmatpush1.msra.mxu0 0.0
        %690 = vmatprep.subr.mxu0 0.0
        %691 = vmatpush1.msra.mxu0 0.0
        %692 = vmatprep.subr.mxu0 0.0
        %693 = vmatpush1.msra.mxu0 0.0
        %694 = vmatprep.subr.mxu0 0.0
        %695 = vmatpush1.msra.mxu0 0.0
        %696 = vmatprep.subr.mxu0 0.0
        %697 = vmatpush1.msra.mxu0 0.0
        %698 = vmatprep.subr.mxu0 0.0
        %699 = vmatpush1.msra.mxu0 0.0
        %700 = vmatprep.subr.mxu0 0.0
        %701 = vmatpush1.msra.mxu0 0.0
        %702 = vmatprep.subr.mxu0 0.0
        %703 = vmatpush1.msra.mxu0 0.0
        %704 = vmatprep.subr.mxu0 0.0
        %705 = vmatpush1.msra.mxu0 0.0
        %706 = vmatprep.subr.mxu0 0.0
        %707 = vmatpush1.msra.mxu0 0.0
        %708 = vmatprep.subr.mxu0 0.0
        %709 = vmatpush1.msra.mxu0 0.0
        %710 = vmatprep.subr.mxu0 0.0
        %711 = vmatpush1.msra.mxu0 0.0
        %712 = vmatprep.subr.mxu0 0.0
        %713 = vmatpush1.msra.mxu0 0.0
        %714 = vmatprep.subr.mxu0 0.0
        %715 = vmatpush1.msra.mxu0 0.0
        %716 = vmatprep.subr.mxu0 0.0
        %717 = vmatpush1.msra.mxu0 0.0
        %718 = vmatprep.subr.mxu0 0.0
        %719 = vmatpush1.msra.mxu0 0.0
        %720 = vmatprep.subr.mxu0 0.0
        %721 = vmatpush1.msra.mxu0 0.0
        %722 = vmatprep.mubr.f32.mxu0 0.0
        %v723 = vand.u32 %v394, 4294901760
        %v724 = vsub.f32 %v394, %v723
        %v725 = vand.u32 %v724, 4294901760
        %726 = vmatmul.mubr.f32.gmra.mrb[0].mxu0 %v725
        %v727 = vpop.f32.mrb[0].mxu0
        %v728 = vadd.f32 %v646, %v727
        %v729 = vpop.f32.mrb[0].mxu0
        %730 = vmatprep.mubr.f32.mxu0 0.0
        %v731 = vand.u32 %v397, 4294901760
        %v732 = vsub.f32 %v397, %v731
        %v733 = vand.u32 %v732, 4294901760
        %734 = vmatmul.mubr.f32.gmra.mrb[0].mxu0 %v733
        %v735 = vpop.f32.mrb[0].mxu0
        %v736 = vadd.f32 %v653, %v735
        %v737 = vpop.f32.mrb[0].mxu0
        %738 = vdwg.mxu0
        %739 = vmatprep.subr.mxu0 0.0
        %v740 = vand.u32 %v390, 4294901760
        %v741 = vsub.f32 %v390, %v740
        %v742 = vand.u32 %v741, 4294901760
        %743 = vmatpush1.msra.mxu0 %v742
        %744 = vmatprep.subr.mxu0 0.0
        %v745 = vand.u32 %v391, 4294901760
        %v746 = vsub.f32 %v391, %v745
        %v747 = vand.u32 %v746, 4294901760
        %748 = vmatpush1.msra.mxu0 %v747
        %749 = vmatprep.subr.mxu0 0.0
        %750 = vmatpush1.msra.mxu0 0.0
        %751 = vmatprep.subr.mxu0 0.0
        %752 = vmatpush1.msra.mxu0 0.0
        %753 = vmatprep.subr.mxu0 0.0
        %754 = vmatpush1.msra.mxu0 0.0
        %755 = vmatprep.subr.mxu0 0.0
        %756 = vmatpush1.msra.mxu0 0.0
        %757 = vmatprep.subr.mxu0 0.0
        %758 = vmatpush1.msra.mxu0 0.0
        %759 = vmatprep.subr.mxu0 0.0
        %760 = vmatpush1.msra.mxu0 0.0
        %761 = vmatprep.subr.mxu0 0.0
        %762 = vmatpush1.msra.mxu0 0.0
        %763 = vmatprep.subr.mxu0 0.0
        %764 = vmatpush1.msra.mxu0 0.0
        %765 = vmatprep.subr.mxu0 0.0
        %766 = vmatpush1.msra.mxu0 0.0
        %767 = vmatprep.subr.mxu0 0.0
        %768 = vmatpush1.msra.mxu0 0.0
        %769 = vmatprep.subr.mxu0 0.0
        %770 = vmatpush1.msra.mxu0 0.0
        %771 = vmatprep.subr.mxu0 0.0
        %772 = vmatpush1.msra.mxu0 0.0
        %773 = vmatprep.subr.mxu0 0.0
        %774 = vmatpush1.msra.mxu0 0.0
        %775 = vmatprep.subr.mxu0 0.0
        %776 = vmatpush1.msra.mxu0 0.0
        %777 = vmatprep.subr.mxu0 0.0
        %778 = vmatpush1.msra.mxu0 0.0
        %779 = vmatprep.subr.mxu0 0.0
        %780 = vmatpush1.msra.mxu0 0.0
        %781 = vmatprep.subr.mxu0 0.0
        %782 = vmatpush1.msra.mxu0 0.0
        %783 = vmatprep.subr.mxu0 0.0
        %784 = vmatpush1.msra.mxu0 0.0
        %785 = vmatprep.subr.mxu0 0.0
        %786 = vmatpush1.msra.mxu0 0.0
        %787 = vmatprep.subr.mxu0 0.0
        %788 = vmatpush1.msra.mxu0 0.0
        %789 = vmatprep.subr.mxu0 0.0
        %790 = vmatpush1.msra.mxu0 0.0
        %791 = vmatprep.subr.mxu0 0.0
        %792 = vmatpush1.msra.mxu0 0.0
        %793 = vmatprep.subr.mxu0 0.0
        %794 = vmatpush1.msra.mxu0 0.0
        %795 = vmatprep.subr.mxu0 0.0
        %796 = vmatpush1.msra.mxu0 0.0
        %797 = vmatprep.subr.mxu0 0.0
        %798 = vmatpush1.msra.mxu0 0.0
        %799 = vmatprep.subr.mxu0 0.0
        %800 = vmatpush1.msra.mxu0 0.0
        %801 = vmatprep.subr.mxu0 0.0
        %802 = vmatpush1.msra.mxu0 0.0
        %803 = vmatprep.subr.mxu0 0.0
        %804 = vmatpush1.msra.mxu0 0.0
        %805 = vmatprep.subr.mxu0 0.0
        %806 = vmatpush1.msra.mxu0 0.0
        %807 = vmatprep.subr.mxu0 0.0
        %808 = vmatpush1.msra.mxu0 0.0
        %809 = vmatprep.mubr.f32.mxu0 0.0
        %v810 = vand.u32 %v394, 4294901760
        %811 = vmatmul.mubr.f32.gmra.mrb[0].mxu0 %v810
        %v812 = vpop.f32.mrb[0].mxu0
        %v813 = vadd.f32 %v728, %v812
        %v814 = vpop.f32.mrb[0].mxu0
        %815 = vmatprep.mubr.f32.mxu0 0.0
        %v816 = vand.u32 %v397, 4294901760
        %817 = vmatmul.mubr.f32.gmra.mrb[0].mxu0 %v816
        %v818 = vpop.f32.mrb[0].mxu0
        %v819 = vadd.f32 %v736, %v818
        %v820 = vpop.f32.mrb[0].mxu0
        %821 = vdwg.mxu0
        %822 = vmatprep.subr.mxu0 0.0
        %v823 = vand.u32 %v390, 4294901760
        %824 = vmatpush1.msra.mxu0 %v823
        %825 = vmatprep.subr.mxu0 0.0
        %v826 = vand.u32 %v391, 4294901760
        %827 = vmatpush1.msra.mxu0 %v826
        %828 = vmatprep.subr.mxu0 0.0
        %829 = vmatpush1.msra.mxu0 0.0
        %830 = vmatprep.subr.mxu0 0.0
        %831 = vmatpush1.msra.mxu0 0.0
        %832 = vmatprep.subr.mxu0 0.0
        %833 = vmatpush1.msra.mxu0 0.0
        %834 = vmatprep.subr.mxu0 0.0
        %835 = vmatpush1.msra.mxu0 0.0
        %836 = vmatprep.subr.mxu0 0.0
        %837 = vmatpush1.msra.mxu0 0.0
        %838 = vmatprep.subr.mxu0 0.0
        %839 = vmatpush1.msra.mxu0 0.0
        %840 = vmatprep.subr.mxu0 0.0
        %841 = vmatpush1.msra.mxu0 0.0
        %842 = vmatprep.subr.mxu0 0.0
        %843 = vmatpush1.msra.mxu0 0.0
        %844 = vmatprep.subr.mxu0 0.0
        %845 = vmatpush1.msra.mxu0 0.0
        %846 = vmatprep.subr.mxu0 0.0
        %847 = vmatpush1.msra.mxu0 0.0
        %848 = vmatprep.subr.mxu0 0.0
        %849 = vmatpush1.msra.mxu0 0.0
        %850 = vmatprep.subr.mxu0 0.0
        %851 = vmatpush1.msra.mxu0 0.0
        %852 = vmatprep.subr.mxu0 0.0
        %853 = vmatpush1.msra.mxu0 0.0
        %854 = vmatprep.subr.mxu0 0.0
        %855 = vmatpush1.msra.mxu0 0.0
        %856 = vmatprep.subr.mxu0 0.0
        %857 = vmatpush1.msra.mxu0 0.0
        %858 = vmatprep.subr.mxu0 0.0
        %859 = vmatpush1.msra.mxu0 0.0
        %860 = vmatprep.subr.mxu0 0.0
        %861 = vmatpush1.msra.mxu0 0.0
        %862 = vmatprep.subr.mxu0 0.0
        %863 = vmatpush1.msra.mxu0 0.0
        %864 = vmatprep.subr.mxu0 0.0
        %865 = vmatpush1.msra.mxu0 0.0
        %866 = vmatprep.subr.mxu0 0.0
        %867 = vmatpush1.msra.mxu0 0.0
        %868 = vmatprep.subr.mxu0 0.0
        %869 = vmatpush1.msra.mxu0 0.0
        %870 = vmatprep.subr.mxu0 0.0
        %871 = vmatpush1.msra.mxu0 0.0
        %872 = vmatprep.subr.mxu0 0.0
        %873 = vmatpush1.msra.mxu0 0.0
        %874 = vmatprep.subr.mxu0 0.0
        %875 = vmatpush1.msra.mxu0 0.0
        %876 = vmatprep.subr.mxu0 0.0
        %877 = vmatpush1.msra.mxu0 0.0
        %878 = vmatprep.subr.mxu0 0.0
        %879 = vmatpush1.msra.mxu0 0.0
        %880 = vmatprep.subr.mxu0 0.0
        %881 = vmatpush1.msra.mxu0 0.0
        %882 = vmatprep.subr.mxu0 0.0
        %883 = vmatpush1.msra.mxu0 0.0
        %884 = vmatprep.subr.mxu0 0.0
        %885 = vmatpush1.msra.mxu0 0.0
        %886 = vmatprep.subr.mxu0 0.0
        %887 = vmatpush1.msra.mxu0 0.0
        %888 = vmatprep.mubr.f32.mxu0 0.0
        %v889 = vand.u32 %v394, 4294901760
        %890 = vmatmul.mubr.f32.gmra.mrb[0].mxu0 %v889
        %v891 = vpop.f32.mrb[0].mxu0
        %v892 = vadd.f32 %v813, %v891
        %v893 = vpop.f32.mrb[0].mxu0
        %894 = vmatprep.mubr.f32.mxu0 0.0
        %v895 = vand.u32 %v397, 4294901760
        %896 = vmatmul.mubr.f32.gmra.mrb[0].mxu0 %v895
        %v897 = vpop.f32.mrb[0].mxu0
        %v898 = vadd.f32 %v819, %v897
        %v899 = vpop.f32.mrb[0].mxu0
        %900 = vdwg.mxu0
        %v901 = vld [vmem:[%s2] sm:$0xff]
        %v902 = vld [vmem:[%s2 + $0x8] sm:$0xff]
        %v904 = vsel %vm392, %v892, 0
        %v907 = vsel %vm392, %v898, 0
        %909 = vmatprep.subr.mxu0 0.0
        %v910 = vand.u32 %v901, 4294901760
        %911 = vmatpush1.msra.mxu0 %v910
        %912 = vmatprep.subr.mxu0 0.0
        %v913 = vand.u32 %v902, 4294901760
        %914 = vmatpush1.msra.mxu0 %v913
        %915 = vmatprep.subr.mxu0 0.0
        %916 = vmatpush1.msra.mxu0 0.0
        %917 = vmatprep.subr.mxu0 0.0
        %918 = vmatpush1.msra.mxu0 0.0
        %919 = vmatprep.subr.mxu0 0.0
        %920 = vmatpush1.msra.mxu0 0.0
        %921 = vmatprep.subr.mxu0 0.0
        %922 = vmatpush1.msra.mxu0 0.0
        %923 = vmatprep.subr.mxu0 0.0
        %924 = vmatpush1.msra.mxu0 0.0
        %925 = vmatprep.subr.mxu0 0.0
        %926 = vmatpush1.msra.mxu0 0.0
        %927 = vmatprep.subr.mxu0 0.0
        %928 = vmatpush1.msra.mxu0 0.0
        %929 = vmatprep.subr.mxu0 0.0
        %930 = vmatpush1.msra.mxu0 0.0
        %931 = vmatprep.subr.mxu0 0.0
        %932 = vmatpush1.msra.mxu0 0.0
        %933 = vmatprep.subr.mxu0 0.0
        %934 = vmatpush1.msra.mxu0 0.0
        %935 = vmatprep.subr.mxu0 0.0
        %936 = vmatpush1.msra.mxu0 0.0
        %937 = vmatprep.subr.mxu0 0.0
        %938 = vmatpush1.msra.mxu0 0.0
        %939 = vmatprep.subr.mxu0 0.0
        %940 = vmatpush1.msra.mxu0 0.0
        %941 = vmatprep.subr.mxu0 0.0
        %942 = vmatpush1.msra.mxu0 0.0
        %943 = vmatprep.subr.mxu0 0.0
        %944 = vmatpush1.msra.mxu0 0.0
        %945 = vmatprep.subr.mxu0 0.0
        %946 = vmatpush1.msra.mxu0 0.0
        %947 = vmatprep.subr.mxu0 0.0
        %948 = vmatpush1.msra.mxu0 0.0
        %949 = vmatprep.subr.mxu0 0.0
        %950 = vmatpush1.msra.mxu0 0.0
        %951 = vmatprep.subr.mxu0 0.0
        %952 = vmatpush1.msra.mxu0 0.0
        %953 = vmatprep.subr.mxu0 0.0
        %954 = vmatpush1.msra.mxu0 0.0
        %955 = vmatprep.subr.mxu0 0.0
        %956 = vmatpush1.msra.mxu0 0.0
        %957 = vmatprep.subr.mxu0 0.0
        %958 = vmatpush1.msra.mxu0 0.0
        %959 = vmatprep.subr.mxu0 0.0
        %960 = vmatpush1.msra.mxu0 0.0
        %961 = vmatprep.subr.mxu0 0.0
        %962 = vmatpush1.msra.mxu0 0.0
        %963 = vmatprep.subr.mxu0 0.0
        %964 = vmatpush1.msra.mxu0 0.0
        %965 = vmatprep.subr.mxu0 0.0
        %966 = vmatpush1.msra.mxu0 0.0
        %967 = vmatprep.subr.mxu0 0.0
        %968 = vmatpush1.msra.mxu0 0.0
        %969 = vmatprep.subr.mxu0 0.0
        %970 = vmatpush1.msra.mxu0 0.0
        %971 = vmatprep.subr.mxu0 0.0
        %972 = vmatpush1.msra.mxu0 0.0
        %973 = vmatprep.subr.mxu0 0.0
        %974 = vmatpush1.msra.mxu0 0.0
        %975 = vmatprep.mubr.f32.mxu0 0.0
        %v976 = vand.u32 %v904, 4294901760
        %v977 = vsub.f32 %v904, %v976
        %v978 = vand.u32 %v977, 4294901760
        %v979 = vsub.f32 %v977, %v978
        %v980 = vand.u32 %v979, 4294901760
        %981 = vmatmul.mubr.f32.gmra.mrb[0].mxu0 %v980
        %v982 = vpop.f32.mrb[0].mxu0
        %v983 = vadd.f32 0.0, %v982
        %v984 = vpop.f32.mrb[0].mxu0
        %985 = vmatprep.mubr.f32.mxu0 0.0
        %v986 = vand.u32 %v907, 4294901760
        %v987 = vsub.f32 %v907, %v986
        %v988 = vand.u32 %v987, 4294901760
        %v989 = vsub.f32 %v987, %v988
        %v990 = vand.u32 %v989, 4294901760
        %991 = vmatmul.mubr.f32.gmra.mrb[0].mxu0 %v990
        %v992 = vpop.f32.mrb[0].mxu0
        %v993 = vadd.f32 0.0, %v992
        %v994 = vpop.f32.mrb[0].mxu0
        %995 = vdwg.mxu0
        %996 = vmatprep.subr.mxu0 0.0
        %v997 = vand.u32 %v901, 4294901760
        %v998 = vsub.f32 %v901, %v997
        %v999 = vand.u32 %v998, 4294901760
        %v1000 = vsub.f32 %v998, %v999
        %v1001 = vand.u32 %v1000, 4294901760
        %1002 = vmatpush1.msra.mxu0 %v1001
        %1003 = vmatprep.subr.mxu0 0.0
        %v1004 = vand.u32 %v902, 4294901760
        %v1005 = vsub.f32 %v902, %v1004
        %v1006 = vand.u32 %v1005, 4294901760
        %v1007 = vsub.f32 %v1005, %v1006
        %v1008 = vand.u32 %v1007, 4294901760
        %1009 = vmatpush1.msra.mxu0 %v1008
        %1010 = vmatprep.subr.mxu0 0.0
        %1011 = vmatpush1.msra.mxu0 0.0
        %1012 = vmatprep.subr.mxu0 0.0
        %1013 = vmatpush1.msra.mxu0 0.0
        %1014 = vmatprep.subr.mxu0 0.0
        %1015 = vmatpush1.msra.mxu0 0.0
        %1016 = vmatprep.subr.mxu0 0.0
        %1017 = vmatpush1.msra.mxu0 0.0
        %1018 = vmatprep.subr.mxu0 0.0
        %1019 = vmatpush1.msra.mxu0 0.0
        %1020 = vmatprep.subr.mxu0 0.0
        %1021 = vmatpush1.msra.mxu0 0.0
        %1022 = vmatprep.subr.mxu0 0.0
        %1023 = vmatpush1.msra.mxu0 0.0
        %1024 = vmatprep.subr.mxu0 0.0
        %1025 = vmatpush1.msra.mxu0 0.0
        %1026 = vmatprep.subr.mxu0 0.0
        %1027 = vmatpush1.msra.mxu0 0.0
        %1028 = vmatprep.subr.mxu0 0.0
        %1029 = vmatpush1.msra.mxu0 0.0
        %1030 = vmatprep.subr.mxu0 0.0
        %1031 = vmatpush1.msra.mxu0 0.0
        %1032 = vmatprep.subr.mxu0 0.0
        %1033 = vmatpush1.msra.mxu0 0.0
        %1034 = vmatprep.subr.mxu0 0.0
        %1035 = vmatpush1.msra.mxu0 0.0
        %1036 = vmatprep.subr.mxu0 0.0
        %1037 = vmatpush1.msra.mxu0 0.0
        %1038 = vmatprep.subr.mxu0 0.0
        %1039 = vmatpush1.msra.mxu0 0.0
        %1040 = vmatprep.subr.mxu0 0.0
        %1041 = vmatpush1.msra.mxu0 0.0
        %1042 = vmatprep.subr.mxu0 0.0
        %1043 = vmatpush1.msra.mxu0 0.0
        %1044 = vmatprep.subr.mxu0 0.0
        %1045 = vmatpush1.msra.mxu0 0.0
        %1046 = vmatprep.subr.mxu0 0.0
        %1047 = vmatpush1.msra.mxu0 0.0
        %1048 = vmatprep.subr.mxu0 0.0
        %1049 = vmatpush1.msra.mxu0 0.0
        %1050 = vmatprep.subr.mxu0 0.0
        %1051 = vmatpush1.msra.mxu0 0.0
        %1052 = vmatprep.subr.mxu0 0.0
        %1053 = vmatpush1.msra.mxu0 0.0
        %1054 = vmatprep.subr.mxu0 0.0
        %1055 = vmatpush1.msra.mxu0 0.0
        %1056 = vmatprep.subr.mxu0 0.0
        %1057 = vmatpush1.msra.mxu0 0.0
        %1058 = vmatprep.subr.mxu0 0.0
        %1059 = vmatpush1.msra.mxu0 0.0
        %1060 = vmatprep.subr.mxu0 0.0
        %1061 = vmatpush1.msra.mxu0 0.0
        %1062 = vmatprep.subr.mxu0 0.0
        %1063 = vmatpush1.msra.mxu0 0.0
        %1064 = vmatprep.subr.mxu0 0.0
        %1065 = vmatpush1.msra.mxu0 0.0
        %1066 = vmatprep.subr.mxu0 0.0
        %1067 = vmatpush1.msra.mxu0 0.0
        %1068 = vmatprep.subr.mxu0 0.0
        %1069 = vmatpush1.msra.mxu0 0.0
        %1070 = vmatprep.mubr.f32.mxu0 0.0
        %v1071 = vand.u32 %v904, 4294901760
        %1072 = vmatmul.mubr.f32.gmra.mrb[0].mxu0 %v1071
        %v1073 = vpop.f32.mrb[0].mxu0
        %v1074 = vadd.f32 %v983, %v1073
        %v1075 = vpop.f32.mrb[0].mxu0
        %1076 = vmatprep.mubr.f32.mxu0 0.0
        %v1077 = vand.u32 %v907, 4294901760
        %1078 = vmatmul.mubr.f32.gmra.mrb[0].mxu0 %v1077
        %v1079 = vpop.f32.mrb[0].mxu0
        %v1080 = vadd.f32 %v993, %v1079
        %v1081 = vpop.f32.mrb[0].mxu0
        %1082 = vdwg.mxu0
        %1083 = vmatprep.subr.mxu0 0.0
        %v1084 = vand.u32 %v901, 4294901760
        %v1085 = vsub.f32 %v901, %v1084
        %1086 = vmatpush1.msra.mxu0 %v1085
        %1087 = vmatprep.subr.mxu0 0.0
        %v1088 = vand.u32 %v902, 4294901760
        %v1089 = vsub.f32 %v902, %v1088
        %1090 = vmatpush1.msra.mxu0 %v1089
        %1091 = vmatprep.subr.mxu0 0.0
        %1092 = vmatpush1.msra.mxu0 0.0
        %1093 = vmatprep.subr.mxu0 0.0
        %1094 = vmatpush1.msra.mxu0 0.0
        %1095 = vmatprep.subr.mxu0 0.0
        %1096 = vmatpush1.msra.mxu0 0.0
        %1097 = vmatprep.subr.mxu0 0.0
        %1098 = vmatpush1.msra.mxu0 0.0
        %1099 = vmatprep.subr.mxu0 0.0
        %1100 = vmatpush1.msra.mxu0 0.0
        %1101 = vmatprep.subr.mxu0 0.0
        %1102 = vmatpush1.msra.mxu0 0.0
        %1103 = vmatprep.subr.mxu0 0.0
        %1104 = vmatpush1.msra.mxu0 0.0
        %1105 = vmatprep.subr.mxu0 0.0
        %1106 = vmatpush1.msra.mxu0 0.0
        %1107 = vmatprep.subr.mxu0 0.0
        %1108 = vmatpush1.msra.mxu0 0.0
        %1109 = vmatprep.subr.mxu0 0.0
        %1110 = vmatpush1.msra.mxu0 0.0
        %1111 = vmatprep.subr.mxu0 0.0
        %1112 = vmatpush1.msra.mxu0 0.0
        %1113 = vmatprep.subr.mxu0 0.0
        %1114 = vmatpush1.msra.mxu0 0.0
        %1115 = vmatprep.subr.mxu0 0.0
        %1116 = vmatpush1.msra.mxu0 0.0
        %1117 = vmatprep.subr.mxu0 0.0
        %1118 = vmatpush1.msra.mxu0 0.0
        %1119 = vmatprep.subr.mxu0 0.0
        %1120 = vmatpush1.msra.mxu0 0.0
        %1121 = vmatprep.subr.mxu0 0.0
        %1122 = vmatpush1.msra.mxu0 0.0
        %1123 = vmatprep.subr.mxu0 0.0
        %1124 = vmatpush1.msra.mxu0 0.0
        %1125 = vmatprep.subr.mxu0 0.0
        %1126 = vmatpush1.msra.mxu0 0.0
        %1127 = vmatprep.subr.mxu0 0.0
        %1128 = vmatpush1.msra.mxu0 0.0
        %1129 = vmatprep.subr.mxu0 0.0
        %1130 = vmatpush1.msra.mxu0 0.0
        %1131 = vmatprep.subr.mxu0 0.0
        %1132 = vmatpush1.msra.mxu0 0.0
        %1133 = vmatprep.subr.mxu0 0.0
        %1134 = vmatpush1.msra.mxu0 0.0
        %1135 = vmatprep.subr.mxu0 0.0
        %1136 = vmatpush1.msra.mxu0 0.0
        %1137 = vmatprep.subr.mxu0 0.0
        %1138 = vmatpush1.msra.mxu0 0.0
        %1139 = vmatprep.subr.mxu0 0.0
        %1140 = vmatpush1.msra.mxu0 0.0
        %1141 = vmatprep.subr.mxu0 0.0
        %1142 = vmatpush1.msra.mxu0 0.0
        %1143 = vmatprep.subr.mxu0 0.0
        %1144 = vmatpush1.msra.mxu0 0.0
        %1145 = vmatprep.subr.mxu0 0.0
        %1146 = vmatpush1.msra.mxu0 0.0
        %1147 = vmatprep.subr.mxu0 0.0
        %1148 = vmatpush1.msra.mxu0 0.0
        %1149 = vmatprep.subr.mxu0 0.0
        %1150 = vmatpush1.msra.mxu0 0.0
        %1151 = vmatprep.mubr.f32.mxu0 0.0
        %v1152 = vand.u32 %v904, 4294901760
        %v1153 = vsub.f32 %v904, %v1152
        %1154 = vmatmul.mubr.f32.gmra.mrb[0].mxu0 %v1153
        %v1155 = vpop.f32.mrb[0].mxu0
        %v1156 = vadd.f32 %v1074, %v1155
        %v1157 = vpop.f32.mrb[0].mxu0
        %1158 = vmatprep.mubr.f32.mxu0 0.0
        %v1159 = vand.u32 %v907, 4294901760
        %v1160 = vsub.f32 %v907, %v1159
        %1161 = vmatmul.mubr.f32.gmra.mrb[0].mxu0 %v1160
        %v1162 = vpop.f32.mrb[0].mxu0
        %v1163 = vadd.f32 %v1080, %v1162
        %v1164 = vpop.f32.mrb[0].mxu0
        %1165 = vdwg.mxu0
        %1166 = vmatprep.subr.mxu0 0.0
        %v1167 = vand.u32 %v901, 4294901760
        %1168 = vmatpush1.msra.mxu0 %v1167
        %1169 = vmatprep.subr.mxu0 0.0
        %v1170 = vand.u32 %v902, 4294901760
        %1171 = vmatpush1.msra.mxu0 %v1170
        %1172 = vmatprep.subr.mxu0 0.0
        %1173 = vmatpush1.msra.mxu0 0.0
        %1174 = vmatprep.subr.mxu0 0.0
        %1175 = vmatpush1.msra.mxu0 0.0
        %1176 = vmatprep.subr.mxu0 0.0
        %1177 = vmatpush1.msra.mxu0 0.0
        %1178 = vmatprep.subr.mxu0 0.0
        %1179 = vmatpush1.msra.mxu0 0.0
        %1180 = vmatprep.subr.mxu0 0.0
        %1181 = vmatpush1.msra.mxu0 0.0
        %1182 = vmatprep.subr.mxu0 0.0
        %1183 = vmatpush1.msra.mxu0 0.0
        %1184 = vmatprep.subr.mxu0 0.0
        %1185 = vmatpush1.msra.mxu0 0.0
        %1186 = vmatprep.subr.mxu0 0.0
        %1187 = vmatpush1.msra.mxu0 0.0
        %1188 = vmatprep.subr.mxu0 0.0
        %1189 = vmatpush1.msra.mxu0 0.0
        %1190 = vmatprep.subr.mxu0 0.0
        %1191 = vmatpush1.msra.mxu0 0.0
        %1192 = vmatprep.subr.mxu0 0.0
        %1193 = vmatpush1.msra.mxu0 0.0
        %1194 = vmatprep.subr.mxu0 0.0
        %1195 = vmatpush1.msra.mxu0 0.0
        %1196 = vmatprep.subr.mxu0 0.0
        %1197 = vmatpush1.msra.mxu0 0.0
        %1198 = vmatprep.subr.mxu0 0.0
        %1199 = vmatpush1.msra.mxu0 0.0
        %1200 = vmatprep.subr.mxu0 0.0
        %1201 = vmatpush1.msra.mxu0 0.0
        %1202 = vmatprep.subr.mxu0 0.0
        %1203 = vmatpush1.msra.mxu0 0.0
        %1204 = vmatprep.subr.mxu0 0.0
        %1205 = vmatpush1.msra.mxu0 0.0
        %1206 = vmatprep.subr.mxu0 0.0
        %1207 = vmatpush1.msra.mxu0 0.0
        %1208 = vmatprep.subr.mxu0 0.0
        %1209 = vmatpush1.msra.mxu0 0.0
        %1210 = vmatprep.subr.mxu0 0.0
        %1211 = vmatpush1.msra.mxu0 0.0
        %1212 = vmatprep.subr.mxu0 0.0
        %1213 = vmatpush1.msra.mxu0 0.0
        %1214 = vmatprep.subr.mxu0 0.0
        %1215 = vmatpush1.msra.mxu0 0.0
        %1216 = vmatprep.subr.mxu0 0.0
        %1217 = vmatpush1.msra.mxu0 0.0
        %1218 = vmatprep.subr.mxu0 0.0
        %1219 = vmatpush1.msra.mxu0 0.0
        %1220 = vmatprep.subr.mxu0 0.0
        %1221 = vmatpush1.msra.mxu0 0.0
        %1222 = vmatprep.subr.mxu0 0.0
        %1223 = vmatpush1.msra.mxu0 0.0
        %1224 = vmatprep.subr.mxu0 0.0
        %1225 = vmatpush1.msra.mxu0 0.0
        %1226 = vmatprep.subr.mxu0 0.0
        %1227 = vmatpush1.msra.mxu0 0.0
        %1228 = vmatprep.subr.mxu0 0.0
        %1229 = vmatpush1.msra.mxu0 0.0
        %1230 = vmatprep.subr.mxu0 0.0
        %1231 = vmatpush1.msra.mxu0 0.0
        %1232 = vmatprep.mubr.f32.mxu0 0.0
        %v1233 = vand.u32 %v904, 4294901760
        %v1234 = vsub.f32 %v904, %v1233
        %v1235 = vand.u32 %v1234, 4294901760
        %1236 = vmatmul.mubr.f32.gmra.mrb[0].mxu0 %v1235
        %v1237 = vpop.f32.mrb[0].mxu0
        %v1238 = vadd.f32 %v1156, %v1237
        %v1239 = vpop.f32.mrb[0].mxu0
        %1240 = vmatprep.mubr.f32.mxu0 0.0
        %v1241 = vand.u32 %v907, 4294901760
        %v1242 = vsub.f32 %v907, %v1241
        %v1243 = vand.u32 %v1242, 4294901760
        %1244 = vmatmul.mubr.f32.gmra.mrb[0].mxu0 %v1243
        %v1245 = vpop.f32.mrb[0].mxu0
        %v1246 = vadd.f32 %v1163, %v1245
        %v1247 = vpop.f32.mrb[0].mxu0
        %1248 = vdwg.mxu0
        %1249 = vmatprep.subr.mxu0 0.0
        %v1250 = vand.u32 %v901, 4294901760
        %v1251 = vsub.f32 %v901, %v1250
        %v1252 = vand.u32 %v1251, 4294901760
        %1253 = vmatpush1.msra.mxu0 %v1252
        %1254 = vmatprep.subr.mxu0 0.0
        %v1255 = vand.u32 %v902, 4294901760
        %v1256 = vsub.f32 %v902, %v1255
        %v1257 = vand.u32 %v1256, 4294901760
        %1258 = vmatpush1.msra.mxu0 %v1257
        %1259 = vmatprep.subr.mxu0 0.0
        %1260 = vmatpush1.msra.mxu0 0.0
        %1261 = vmatprep.subr.mxu0 0.0
        %1262 = vmatpush1.msra.mxu0 0.0
        %1263 = vmatprep.subr.mxu0 0.0
        %1264 = vmatpush1.msra.mxu0 0.0
        %1265 = vmatprep.subr.mxu0 0.0
        %1266 = vmatpush1.msra.mxu0 0.0
        %1267 = vmatprep.subr.mxu0 0.0
        %1268 = vmatpush1.msra.mxu0 0.0
        %1269 = vmatprep.subr.mxu0 0.0
        %1270 = vmatpush1.msra.mxu0 0.0
        %1271 = vmatprep.subr.mxu0 0.0
        %1272 = vmatpush1.msra.mxu0 0.0
        %1273 = vmatprep.subr.mxu0 0.0
        %1274 = vmatpush1.msra.mxu0 0.0
        %1275 = vmatprep.subr.mxu0 0.0
        %1276 = vmatpush1.msra.mxu0 0.0
        %1277 = vmatprep.subr.mxu0 0.0
        %1278 = vmatpush1.msra.mxu0 0.0
        %1279 = vmatprep.subr.mxu0 0.0
        %1280 = vmatpush1.msra.mxu0 0.0
        %1281 = vmatprep.subr.mxu0 0.0
        %1282 = vmatpush1.msra.mxu0 0.0
        %1283 = vmatprep.subr.mxu0 0.0
        %1284 = vmatpush1.msra.mxu0 0.0
        %1285 = vmatprep.subr.mxu0 0.0
        %1286 = vmatpush1.msra.mxu0 0.0
        %1287 = vmatprep.subr.mxu0 0.0
        %1288 = vmatpush1.msra.mxu0 0.0
        %1289 = vmatprep.subr.mxu0 0.0
        %1290 = vmatpush1.msra.mxu0 0.0
        %1291 = vmatprep.subr.mxu0 0.0
        %1292 = vmatpush1.msra.mxu0 0.0
        %1293 = vmatprep.subr.mxu0 0.0
        %1294 = vmatpush1.msra.mxu0 0.0
        %1295 = vmatprep.subr.mxu0 0.0
        %1296 = vmatpush1.msra.mxu0 0.0
        %1297 = vmatprep.subr.mxu0 0.0
        %1298 = vmatpush1.msra.mxu0 0.0
        %1299 = vmatprep.subr.mxu0 0.0
        %1300 = vmatpush1.msra.mxu0 0.0
        %1301 = vmatprep.subr.mxu0 0.0
        %1302 = vmatpush1.msra.mxu0 0.0
        %1303 = vmatprep.subr.mxu0 0.0
        %1304 = vmatpush1.msra.mxu0 0.0
        %1305 = vmatprep.subr.mxu0 0.0
        %1306 = vmatpush1.msra.mxu0 0.0
        %1307 = vmatprep.subr.mxu0 0.0
        %1308 = vmatpush1.msra.mxu0 0.0
        %1309 = vmatprep.subr.mxu0 0.0
        %1310 = vmatpush1.msra.mxu0 0.0
        %1311 = vmatprep.subr.mxu0 0.0
        %1312 = vmatpush1.msra.mxu0 0.0
        %1313 = vmatprep.subr.mxu0 0.0
        %1314 = vmatpush1.msra.mxu0 0.0
        %1315 = vmatprep.subr.mxu0 0.0
        %1316 = vmatpush1.msra.mxu0 0.0
        %1317 = vmatprep.subr.mxu0 0.0
        %1318 = vmatpush1.msra.mxu0 0.0
        %1319 = vmatprep.mubr.f32.mxu0 0.0
        %v1320 = vand.u32 %v904, 4294901760
        %1321 = vmatmul.mubr.f32.gmra.mrb[0].mxu0 %v1320
        %v1322 = vpop.f32.mrb[0].mxu0
        %v1323 = vadd.f32 %v1238, %v1322
        %v1324 = vpop.f32.mrb[0].mxu0
        %1325 = vmatprep.mubr.f32.mxu0 0.0
        %v1326 = vand.u32 %v907, 4294901760
        %1327 = vmatmul.mubr.f32.gmra.mrb[0].mxu0 %v1326
        %v1328 = vpop.f32.mrb[0].mxu0
        %v1329 = vadd.f32 %v1246, %v1328
        %v1330 = vpop.f32.mrb[0].mxu0
        %1331 = vdwg.mxu0
        %1332 = vmatprep.subr.mxu0 0.0
        %v1333 = vand.u32 %v901, 4294901760
        %1334 = vmatpush1.msra.mxu0 %v1333
        %1335 = vmatprep.subr.mxu0 0.0
        %v1336 = vand.u32 %v902, 4294901760
        %1337 = vmatpush1.msra.mxu0 %v1336
        %1338 = vmatprep.subr.mxu0 0.0
        %1339 = vmatpush1.msra.mxu0 0.0
        %1340 = vmatprep.subr.mxu0 0.0
        %1341 = vmatpush1.msra.mxu0 0.0
        %1342 = vmatprep.subr.mxu0 0.0
        %1343 = vmatpush1.msra.mxu0 0.0
        %1344 = vmatprep.subr.mxu0 0.0
        %1345 = vmatpush1.msra.mxu0 0.0
        %1346 = vmatprep.subr.mxu0 0.0
        %1347 = vmatpush1.msra.mxu0 0.0
        %1348 = vmatprep.subr.mxu0 0.0
        %1349 = vmatpush1.msra.mxu0 0.0
        %1350 = vmatprep.subr.mxu0 0.0
        %1351 = vmatpush1.msra.mxu0 0.0
        %1352 = vmatprep.subr.mxu0 0.0
        %1353 = vmatpush1.msra.mxu0 0.0
        %1354 = vmatprep.subr.mxu0 0.0
        %1355 = vmatpush1.msra.mxu0 0.0
        %1356 = vmatprep.subr.mxu0 0.0
        %1357 = vmatpush1.msra.mxu0 0.0
        %1358 = vmatprep.subr.mxu0 0.0
        %1359 = vmatpush1.msra.mxu0 0.0
        %1360 = vmatprep.subr.mxu0 0.0
        %1361 = vmatpush1.msra.mxu0 0.0
        %1362 = vmatprep.subr.mxu0 0.0
        %1363 = vmatpush1.msra.mxu0 0.0
        %1364 = vmatprep.subr.mxu0 0.0
        %1365 = vmatpush1.msra.mxu0 0.0
        %1366 = vmatprep.subr.mxu0 0.0
        %1367 = vmatpush1.msra.mxu0 0.0
        %1368 = vmatprep.subr.mxu0 0.0
        %1369 = vmatpush1.msra.mxu0 0.0
        %1370 = vmatprep.subr.mxu0 0.0
        %1371 = vmatpush1.msra.mxu0 0.0
        %1372 = vmatprep.subr.mxu0 0.0
        %1373 = vmatpush1.msra.mxu0 0.0
        %1374 = vmatprep.subr.mxu0 0.0
        %1375 = vmatpush1.msra.mxu0 0.0
        %1376 = vmatprep.subr.mxu0 0.0
        %1377 = vmatpush1.msra.mxu0 0.0
        %1378 = vmatprep.subr.mxu0 0.0
        %1379 = vmatpush1.msra.mxu0 0.0
        %1380 = vmatprep.subr.mxu0 0.0
        %1381 = vmatpush1.msra.mxu0 0.0
        %1382 = vmatprep.subr.mxu0 0.0
        %1383 = vmatpush1.msra.mxu0 0.0
        %1384 = vmatprep.subr.mxu0 0.0
        %1385 = vmatpush1.msra.mxu0 0.0
        %1386 = vmatprep.subr.mxu0 0.0
        %1387 = vmatpush1.msra.mxu0 0.0
        %1388 = vmatprep.subr.mxu0 0.0
        %1389 = vmatpush1.msra.mxu0 0.0
        %1390 = vmatprep.subr.mxu0 0.0
        %1391 = vmatpush1.msra.mxu0 0.0
        %1392 = vmatprep.subr.mxu0 0.0
        %1393 = vmatpush1.msra.mxu0 0.0
        %1394 = vmatprep.subr.mxu0 0.0
        %1395 = vmatpush1.msra.mxu0 0.0
        %1396 = vmatprep.subr.mxu0 0.0
        %1397 = vmatpush1.msra.mxu0 0.0
        %1398 = vmatprep.mubr.f32.mxu0 0.0
        %v1399 = vand.u32 %v904, 4294901760
        %1400 = vmatmul.mubr.f32.gmra.mrb[0].mxu0 %v1399
        %v1401 = vpop.f32.mrb[0].mxu0
        %v1402 = vadd.f32 %v1323, %v1401
        %v1403 = vpop.f32.mrb[0].mxu0
        %1404 = vmatprep.mubr.f32.mxu0 0.0
        %v1405 = vand.u32 %v907, 4294901760
        %1406 = vmatmul.mubr.f32.gmra.mrb[0].mxu0 %v1405
        %v1407 = vpop.f32.mrb[0].mxu0
        %v1408 = vadd.f32 %v1329, %v1407
        %v1409 = vpop.f32.mrb[0].mxu0
        %1410 = vdwg.mxu0
        %s1411 = scalar_lea.vmem [#allocation2], 16
        %v1412 = vld [vmem:[%s1411] sm:$0xff]
        %v1413 = vld [vmem:[%s1411 + $0x8] sm:$0xff]
        %1414 = vmatprep.subr.mxu0 0.0
        %v1415 = vand.u32 %v1412, 4294901760
        %1416 = vmatpush1.msra.mxu0 %v1415
        %1417 = vmatprep.subr.mxu0 0.0
        %v1418 = vand.u32 %v1413, 4294901760
        %1419 = vmatpush1.msra.mxu0 %v1418
        %1420 = vmatprep.subr.mxu0 0.0
        %1421 = vmatpush1.msra.mxu0 0.0
        %1422 = vmatprep.subr.mxu0 0.0
        %1423 = vmatpush1.msra.mxu0 0.0
        %1424 = vmatprep.subr.mxu0 0.0
        %1425 = vmatpush1.msra.mxu0 0.0
        %1426 = vmatprep.subr.mxu0 0.0
        %1427 = vmatpush1.msra.mxu0 0.0
        %1428 = vmatprep.subr.mxu0 0.0
        %1429 = vmatpush1.msra.mxu0 0.0
        %1430 = vmatprep.subr.mxu0 0.0
        %1431 = vmatpush1.msra.mxu0 0.0
        %1432 = vmatprep.subr.mxu0 0.0
        %1433 = vmatpush1.msra.mxu0 0.0
        %1434 = vmatprep.subr.mxu0 0.0
        %1435 = vmatpush1.msra.mxu0 0.0
        %1436 = vmatprep.subr.mxu0 0.0
        %1437 = vmatpush1.msra.mxu0 0.0
        %1438 = vmatprep.subr.mxu0 0.0
        %1439 = vmatpush1.msra.mxu0 0.0
        %1440 = vmatprep.subr.mxu0 0.0
        %1441 = vmatpush1.msra.mxu0 0.0
        %1442 = vmatprep.subr.mxu0 0.0
        %1443 = vmatpush1.msra.mxu0 0.0
        %1444 = vmatprep.subr.mxu0 0.0
        %1445 = vmatpush1.msra.mxu0 0.0
        %1446 = vmatprep.subr.mxu0 0.0
        %1447 = vmatpush1.msra.mxu0 0.0
        %1448 = vmatprep.subr.mxu0 0.0
        %1449 = vmatpush1.msra.mxu0 0.0
        %1450 = vmatprep.subr.mxu0 0.0
        %1451 = vmatpush1.msra.mxu0 0.0
        %1452 = vmatprep.subr.mxu0 0.0
        %1453 = vmatpush1.msra.mxu0 0.0
        %1454 = vmatprep.subr.mxu0 0.0
        %1455 = vmatpush1.msra.mxu0 0.0
        %1456 = vmatprep.subr.mxu0 0.0
        %1457 = vmatpush1.msra.mxu0 0.0
        %1458 = vmatprep.subr.mxu0 0.0
        %1459 = vmatpush1.msra.mxu0 0.0
        %1460 = vmatprep.subr.mxu0 0.0
        %1461 = vmatpush1.msra.mxu0 0.0
        %1462 = vmatprep.subr.mxu0 0.0
        %1463 = vmatpush1.msra.mxu0 0.0
        %1464 = vmatprep.subr.mxu0 0.0
        %1465 = vmatpush1.msra.mxu0 0.0
        %1466 = vmatprep.subr.mxu0 0.0
        %1467 = vmatpush1.msra.mxu0 0.0
        %1468 = vmatprep.subr.mxu0 0.0
        %1469 = vmatpush1.msra.mxu0 0.0
        %1470 = vmatprep.subr.mxu0 0.0
        %1471 = vmatpush1.msra.mxu0 0.0
        %1472 = vmatprep.subr.mxu0 0.0
        %1473 = vmatpush1.msra.mxu0 0.0
        %1474 = vmatprep.subr.mxu0 0.0
        %1475 = vmatpush1.msra.mxu0 0.0
        %1476 = vmatprep.subr.mxu0 0.0
        %1477 = vmatpush1.msra.mxu0 0.0
        %1478 = vmatprep.subr.mxu0 0.0
        %1479 = vmatpush1.msra.mxu0 0.0
        %1480 = vmatprep.mubr.f32.mxu0 0.0
        %v1481 = vand.u32 %v394, 4294901760
        %v1482 = vsub.f32 %v394, %v1481
        %v1483 = vand.u32 %v1482, 4294901760
        %v1484 = vsub.f32 %v1482, %v1483
        %v1485 = vand.u32 %v1484, 4294901760
        %1486 = vmatmul.mubr.f32.gmra.mrb[0].mxu0 %v1485
        %v1487 = vpop.f32.mrb[0].mxu0
        %v1488 = vadd.f32 0.0, %v1487
        %v1489 = vpop.f32.mrb[0].mxu0
        %1490 = vmatprep.mubr.f32.mxu0 0.0
        %v1491 = vand.u32 %v397, 4294901760
        %v1492 = vsub.f32 %v397, %v1491
        %v1493 = vand.u32 %v1492, 4294901760
        %v1494 = vsub.f32 %v1492, %v1493
        %v1495 = vand.u32 %v1494, 4294901760
        %1496 = vmatmul.mubr.f32.gmra.mrb[0].mxu0 %v1495
        %v1497 = vpop.f32.mrb[0].mxu0
        %v1498 = vadd.f32 0.0, %v1497
        %v1499 = vpop.f32.mrb[0].mxu0
        %1500 = vdwg.mxu0
        %1501 = vmatprep.subr.mxu0 0.0
        %v1502 = vand.u32 %v1412, 4294901760
        %v1503 = vsub.f32 %v1412, %v1502
        %v1504 = vand.u32 %v1503, 4294901760
        %v1505 = vsub.f32 %v1503, %v1504
        %v1506 = vand.u32 %v1505, 4294901760
        %1507 = vmatpush1.msra.mxu0 %v1506
        %1508 = vmatprep.subr.mxu0 0.0
        %v1509 = vand.u32 %v1413, 4294901760
        %v1510 = vsub.f32 %v1413, %v1509
        %v1511 = vand.u32 %v1510, 4294901760
        %v1512 = vsub.f32 %v1510, %v1511
        %v1513 = vand.u32 %v1512, 4294901760
        %1514 = vmatpush1.msra.mxu0 %v1513
        %1515 = vmatprep.subr.mxu0 0.0
        %1516 = vmatpush1.msra.mxu0 0.0
        %1517 = vmatprep.subr.mxu0 0.0
        %1518 = vmatpush1.msra.mxu0 0.0
        %1519 = vmatprep.subr.mxu0 0.0
        %1520 = vmatpush1.msra.mxu0 0.0
        %1521 = vmatprep.subr.mxu0 0.0
        %1522 = vmatpush1.msra.mxu0 0.0
        %1523 = vmatprep.subr.mxu0 0.0
        %1524 = vmatpush1.msra.mxu0 0.0
        %1525 = vmatprep.subr.mxu0 0.0
        %1526 = vmatpush1.msra.mxu0 0.0
        %1527 = vmatprep.subr.mxu0 0.0
        %1528 = vmatpush1.msra.mxu0 0.0
        %1529 = vmatprep.subr.mxu0 0.0
        %1530 = vmatpush1.msra.mxu0 0.0
        %1531 = vmatprep.subr.mxu0 0.0
        %1532 = vmatpush1.msra.mxu0 0.0
        %1533 = vmatprep.subr.mxu0 0.0
        %1534 = vmatpush1.msra.mxu0 0.0
        %1535 = vmatprep.subr.mxu0 0.0
        %1536 = vmatpush1.msra.mxu0 0.0
        %1537 = vmatprep.subr.mxu0 0.0
        %1538 = vmatpush1.msra.mxu0 0.0
        %1539 = vmatprep.subr.mxu0 0.0
        %1540 = vmatpush1.msra.mxu0 0.0
        %1541 = vmatprep.subr.mxu0 0.0
        %1542 = vmatpush1.msra.mxu0 0.0
        %1543 = vmatprep.subr.mxu0 0.0
        %1544 = vmatpush1.msra.mxu0 0.0
        %1545 = vmatprep.subr.mxu0 0.0
        %1546 = vmatpush1.msra.mxu0 0.0
        %1547 = vmatprep.subr.mxu0 0.0
        %1548 = vmatpush1.msra.mxu0 0.0
        %1549 = vmatprep.subr.mxu0 0.0
        %1550 = vmatpush1.msra.mxu0 0.0
        %1551 = vmatprep.subr.mxu0 0.0
        %1552 = vmatpush1.msra.mxu0 0.0
        %1553 = vmatprep.subr.mxu0 0.0
        %1554 = vmatpush1.msra.mxu0 0.0
        %1555 = vmatprep.subr.mxu0 0.0
        %1556 = vmatpush1.msra.mxu0 0.0
        %1557 = vmatprep.subr.mxu0 0.0
        %1558 = vmatpush1.msra.mxu0 0.0
        %1559 = vmatprep.subr.mxu0 0.0
        %1560 = vmatpush1.msra.mxu0 0.0
        %1561 = vmatprep.subr.mxu0 0.0
        %1562 = vmatpush1.msra.mxu0 0.0
        %1563 = vmatprep.subr.mxu0 0.0
        %1564 = vmatpush1.msra.mxu0 0.0
        %1565 = vmatprep.subr.mxu0 0.0
        %1566 = vmatpush1.msra.mxu0 0.0
        %1567 = vmatprep.subr.mxu0 0.0
        %1568 = vmatpush1.msra.mxu0 0.0
        %1569 = vmatprep.subr.mxu0 0.0
        %1570 = vmatpush1.msra.mxu0 0.0
        %1571 = vmatprep.subr.mxu0 0.0
        %1572 = vmatpush1.msra.mxu0 0.0
        %1573 = vmatprep.subr.mxu0 0.0
        %1574 = vmatpush1.msra.mxu0 0.0
        %1575 = vmatprep.mubr.f32.mxu0 0.0
        %v1576 = vand.u32 %v394, 4294901760
        %1577 = vmatmul.mubr.f32.gmra.mrb[0].mxu0 %v1576
        %v1578 = vpop.f32.mrb[0].mxu0
        %v1579 = vadd.f32 %v1488, %v1578
        %v1580 = vpop.f32.mrb[0].mxu0
        %1581 = vmatprep.mubr.f32.mxu0 0.0
        %v1582 = vand.u32 %v397, 4294901760
        %1583 = vmatmul.mubr.f32.gmra.mrb[0].mxu0 %v1582
        %v1584 = vpop.f32.mrb[0].mxu0
        %v1585 = vadd.f32 %v1498, %v1584
        %v1586 = vpop.f32.mrb[0].mxu0
        %1587 = vdwg.mxu0
        %1588 = vmatprep.subr.mxu0 0.0
        %v1589 = vand.u32 %v1412, 4294901760
        %v1590 = vsub.f32 %v1412, %v1589
        %1591 = vmatpush1.msra.mxu0 %v1590
        %1592 = vmatprep.subr.mxu0 0.0
        %v1593 = vand.u32 %v1413, 4294901760
        %v1594 = vsub.f32 %v1413, %v1593
        %1595 = vmatpush1.msra.mxu0 %v1594
        %1596 = vmatprep.subr.mxu0 0.0
        %1597 = vmatpush1.msra.mxu0 0.0
        %1598 = vmatprep.subr.mxu0 0.0
        %1599 = vmatpush1.msra.mxu0 0.0
        %1600 = vmatprep.subr.mxu0 0.0
        %1601 = vmatpush1.msra.mxu0 0.0
        %1602 = vmatprep.subr.mxu0 0.0
        %1603 = vmatpush1.msra.mxu0 0.0
        %1604 = vmatprep.subr.mxu0 0.0
        %1605 = vmatpush1.msra.mxu0 0.0
        %1606 = vmatprep.subr.mxu0 0.0
        %1607 = vmatpush1.msra.mxu0 0.0
        %1608 = vmatprep.subr.mxu0 0.0
        %1609 = vmatpush1.msra.mxu0 0.0
        %1610 = vmatprep.subr.mxu0 0.0
        %1611 = vmatpush1.msra.mxu0 0.0
        %1612 = vmatprep.subr.mxu0 0.0
        %1613 = vmatpush1.msra.mxu0 0.0
        %1614 = vmatprep.subr.mxu0 0.0
        %1615 = vmatpush1.msra.mxu0 0.0
        %1616 = vmatprep.subr.mxu0 0.0
        %1617 = vmatpush1.msra.mxu0 0.0
        %1618 = vmatprep.subr.mxu0 0.0
        %1619 = vmatpush1.msra.mxu0 0.0
        %1620 = vmatprep.subr.mxu0 0.0
        %1621 = vmatpush1.msra.mxu0 0.0
        %1622 = vmatprep.subr.mxu0 0.0
        %1623 = vmatpush1.msra.mxu0 0.0
        %1624 = vmatprep.subr.mxu0 0.0
        %1625 = vmatpush1.msra.mxu0 0.0
        %1626 = vmatprep.subr.mxu0 0.0
        %1627 = vmatpush1.msra.mxu0 0.0
        %1628 = vmatprep.subr.mxu0 0.0
        %1629 = vmatpush1.msra.mxu0 0.0
        %1630 = vmatprep.subr.mxu0 0.0
        %1631 = vmatpush1.msra.mxu0 0.0
        %1632 = vmatprep.subr.mxu0 0.0
        %1633 = vmatpush1.msra.mxu0 0.0
        %1634 = vmatprep.subr.mxu0 0.0
        %1635 = vmatpush1.msra.mxu0 0.0
        %1636 = vmatprep.subr.mxu0 0.0
        %1637 = vmatpush1.msra.mxu0 0.0
        %1638 = vmatprep.subr.mxu0 0.0
        %1639 = vmatpush1.msra.mxu0 0.0
        %1640 = vmatprep.subr.mxu0 0.0
        %1641 = vmatpush1.msra.mxu0 0.0
        %1642 = vmatprep.subr.mxu0 0.0
        %1643 = vmatpush1.msra.mxu0 0.0
        %1644 = vmatprep.subr.mxu0 0.0
        %1645 = vmatpush1.msra.mxu0 0.0
        %1646 = vmatprep.subr.mxu0 0.0
        %1647 = vmatpush1.msra.mxu0 0.0
        %1648 = vmatprep.subr.mxu0 0.0
        %1649 = vmatpush1.msra.mxu0 0.0
        %1650 = vmatprep.subr.mxu0 0.0
        %1651 = vmatpush1.msra.mxu0 0.0
        %1652 = vmatprep.subr.mxu0 0.0
        %1653 = vmatpush1.msra.mxu0 0.0
        %1654 = vmatprep.subr.mxu0 0.0
        %1655 = vmatpush1.msra.mxu0 0.0
        %1656 = vmatprep.mubr.f32.mxu0 0.0
        %v1657 = vand.u32 %v394, 4294901760
        %v1658 = vsub.f32 %v394, %v1657
        %1659 = vmatmul.mubr.f32.gmra.mrb[0].mxu0 %v1658
        %v1660 = vpop.f32.mrb[0].mxu0
        %v1661 = vadd.f32 %v1579, %v1660
        %v1662 = vpop.f32.mrb[0].mxu0
        %1663 = vmatprep.mubr.f32.mxu0 0.0
        %v1664 = vand.u32 %v397, 4294901760
        %v1665 = vsub.f32 %v397, %v1664
        %1666 = vmatmul.mubr.f32.gmra.mrb[0].mxu0 %v1665
        %v1667 = vpop.f32.mrb[0].mxu0
        %v1668 = vadd.f32 %v1585, %v1667
        %v1669 = vpop.f32.mrb[0].mxu0
        %1670 = vdwg.mxu0
        %1671 = vmatprep.subr.mxu0 0.0
        %v1672 = vand.u32 %v1412, 4294901760
        %1673 = vmatpush1.msra.mxu0 %v1672
        %1674 = vmatprep.subr.mxu0 0.0
        %v1675 = vand.u32 %v1413, 4294901760
        %1676 = vmatpush1.msra.mxu0 %v1675
        %1677 = vmatprep.subr.mxu0 0.0
        %1678 = vmatpush1.msra.mxu0 0.0
        %1679 = vmatprep.subr.mxu0 0.0
        %1680 = vmatpush1.msra.mxu0 0.0
        %1681 = vmatprep.subr.mxu0 0.0
        %1682 = vmatpush1.msra.mxu0 0.0
        %1683 = vmatprep.subr.mxu0 0.0
        %1684 = vmatpush1.msra.mxu0 0.0
        %1685 = vmatprep.subr.mxu0 0.0
        %1686 = vmatpush1.msra.mxu0 0.0
        %1687 = vmatprep.subr.mxu0 0.0
        %1688 = vmatpush1.msra.mxu0 0.0
        %1689 = vmatprep.subr.mxu0 0.0
        %1690 = vmatpush1.msra.mxu0 0.0
        %1691 = vmatprep.subr.mxu0 0.0
        %1692 = vmatpush1.msra.mxu0 0.0
        %1693 = vmatprep.subr.mxu0 0.0
        %1694 = vmatpush1.msra.mxu0 0.0
        %1695 = vmatprep.subr.mxu0 0.0
        %1696 = vmatpush1.msra.mxu0 0.0
        %1697 = vmatprep.subr.mxu0 0.0
        %1698 = vmatpush1.msra.mxu0 0.0
        %1699 = vmatprep.subr.mxu0 0.0
        %1700 = vmatpush1.msra.mxu0 0.0
        %1701 = vmatprep.subr.mxu0 0.0
        %1702 = vmatpush1.msra.mxu0 0.0
        %1703 = vmatprep.subr.mxu0 0.0
        %1704 = vmatpush1.msra.mxu0 0.0
        %1705 = vmatprep.subr.mxu0 0.0
        %1706 = vmatpush1.msra.mxu0 0.0
        %1707 = vmatprep.subr.mxu0 0.0
        %1708 = vmatpush1.msra.mxu0 0.0
        %1709 = vmatprep.subr.mxu0 0.0
        %1710 = vmatpush1.msra.mxu0 0.0
        %1711 = vmatprep.subr.mxu0 0.0
        %1712 = vmatpush1.msra.mxu0 0.0
        %1713 = vmatprep.subr.mxu0 0.0
        %1714 = vmatpush1.msra.mxu0 0.0
        %1715 = vmatprep.subr.mxu0 0.0
        %1716 = vmatpush1.msra.mxu0 0.0
        %1717 = vmatprep.subr.mxu0 0.0
        %1718 = vmatpush1.msra.mxu0 0.0
        %1719 = vmatprep.subr.mxu0 0.0
        %1720 = vmatpush1.msra.mxu0 0.0
        %1721 = vmatprep.subr.mxu0 0.0
        %1722 = vmatpush1.msra.mxu0 0.0
        %1723 = vmatprep.subr.mxu0 0.0
        %1724 = vmatpush1.msra.mxu0 0.0
        %1725 = vmatprep.subr.mxu0 0.0
        %1726 = vmatpush1.msra.mxu0 0.0
        %1727 = vmatprep.subr.mxu0 0.0
        %1728 = vmatpush1.msra.mxu0 0.0
        %1729 = vmatprep.subr.mxu0 0.0
        %1730 = vmatpush1.msra.mxu0 0.0
        %1731 = vmatprep.subr.mxu0 0.0
        %1732 = vmatpush1.msra.mxu0 0.0
        %1733 = vmatprep.subr.mxu0 0.0
        %1734 = vmatpush1.msra.mxu0 0.0
        %1735 = vmatprep.subr.mxu0 0.0
        %1736 = vmatpush1.msra.mxu0 0.0
        %1737 = vmatprep.mubr.f32.mxu0 0.0
        %v1738 = vand.u32 %v394, 4294901760
        %v1739 = vsub.f32 %v394, %v1738
        %v1740 = vand.u32 %v1739, 4294901760
        %1741 = vmatmul.mubr.f32.gmra.mrb[0].mxu0 %v1740
        %v1742 = vpop.f32.mrb[0].mxu0
        %v1743 = vadd.f32 %v1661, %v1742
        %v1744 = vpop.f32.mrb[0].mxu0
        %1745 = vmatprep.mubr.f32.mxu0 0.0
        %v1746 = vand.u32 %v397, 4294901760
        %v1747 = vsub.f32 %v397, %v1746
        %v1748 = vand.u32 %v1747, 4294901760
        %1749 = vmatmul.mubr.f32.gmra.mrb[0].mxu0 %v1748
        %v1750 = vpop.f32.mrb[0].mxu0
        %v1751 = vadd.f32 %v1668, %v1750
        %v1752 = vpop.f32.mrb[0].mxu0
        %1753 = vdwg.mxu0
        %1754 = vmatprep.subr.mxu0 0.0
        %v1755 = vand.u32 %v1412, 4294901760
        %v1756 = vsub.f32 %v1412, %v1755
        %v1757 = vand.u32 %v1756, 4294901760
        %1758 = vmatpush1.msra.mxu0 %v1757
        %1759 = vmatprep.subr.mxu0 0.0
        %v1760 = vand.u32 %v1413, 4294901760
        %v1761 = vsub.f32 %v1413, %v1760
        %v1762 = vand.u32 %v1761, 4294901760
        %1763 = vmatpush1.msra.mxu0 %v1762
        %1764 = vmatprep.subr.mxu0 0.0
        %1765 = vmatpush1.msra.mxu0 0.0
        %1766 = vmatprep.subr.mxu0 0.0
        %1767 = vmatpush1.msra.mxu0 0.0
        %1768 = vmatprep.subr.mxu0 0.0
        %1769 = vmatpush1.msra.mxu0 0.0
        %1770 = vmatprep.subr.mxu0 0.0
        %1771 = vmatpush1.msra.mxu0 0.0
        %1772 = vmatprep.subr.mxu0 0.0
        %1773 = vmatpush1.msra.mxu0 0.0
        %1774 = vmatprep.subr.mxu0 0.0
        %1775 = vmatpush1.msra.mxu0 0.0
        %1776 = vmatprep.subr.mxu0 0.0
        %1777 = vmatpush1.msra.mxu0 0.0
        %1778 = vmatprep.subr.mxu0 0.0
        %1779 = vmatpush1.msra.mxu0 0.0
        %1780 = vmatprep.subr.mxu0 0.0
        %1781 = vmatpush1.msra.mxu0 0.0
        %1782 = vmatprep.subr.mxu0 0.0
        %1783 = vmatpush1.msra.mxu0 0.0
        %1784 = vmatprep.subr.mxu0 0.0
        %1785 = vmatpush1.msra.mxu0 0.0
        %1786 = vmatprep.subr.mxu0 0.0
        %1787 = vmatpush1.msra.mxu0 0.0
        %1788 = vmatprep.subr.mxu0 0.0
        %1789 = vmatpush1.msra.mxu0 0.0
        %1790 = vmatprep.subr.mxu0 0.0
        %1791 = vmatpush1.msra.mxu0 0.0
        %1792 = vmatprep.subr.mxu0 0.0
        %1793 = vmatpush1.msra.mxu0 0.0
        %1794 = vmatprep.subr.mxu0 0.0
        %1795 = vmatpush1.msra.mxu0 0.0
        %1796 = vmatprep.subr.mxu0 0.0
        %1797 = vmatpush1.msra.mxu0 0.0
        %1798 = vmatprep.subr.mxu0 0.0
        %1799 = vmatpush1.msra.mxu0 0.0
        %1800 = vmatprep.subr.mxu0 0.0
        %1801 = vmatpush1.msra.mxu0 0.0
        %1802 = vmatprep.subr.mxu0 0.0
        %1803 = vmatpush1.msra.mxu0 0.0
        %1804 = vmatprep.subr.mxu0 0.0
        %1805 = vmatpush1.msra.mxu0 0.0
        %1806 = vmatprep.subr.mxu0 0.0
        %1807 = vmatpush1.msra.mxu0 0.0
        %1808 = vmatprep.subr.mxu0 0.0
        %1809 = vmatpush1.msra.mxu0 0.0
        %1810 = vmatprep.subr.mxu0 0.0
        %1811 = vmatpush1.msra.mxu0 0.0
        %1812 = vmatprep.subr.mxu0 0.0
        %1813 = vmatpush1.msra.mxu0 0.0
        %1814 = vmatprep.subr.mxu0 0.0
        %1815 = vmatpush1.msra.mxu0 0.0
        %1816 = vmatprep.subr.mxu0 0.0
        %1817 = vmatpush1.msra.mxu0 0.0
        %1818 = vmatprep.subr.mxu0 0.0
        %1819 = vmatpush1.msra.mxu0 0.0
        %1820 = vmatprep.subr.mxu0 0.0
        %1821 = vmatpush1.msra.mxu0 0.0
        %1822 = vmatprep.subr.mxu0 0.0
        %1823 = vmatpush1.msra.mxu0 0.0
        %1824 = vmatprep.mubr.f32.mxu0 0.0
        %v1825 = vand.u32 %v394, 4294901760
        %1826 = vmatmul.mubr.f32.gmra.mrb[0].mxu0 %v1825
        %v1827 = vpop.f32.mrb[0].mxu0
        %v1828 = vadd.f32 %v1743, %v1827
        %v1829 = vpop.f32.mrb[0].mxu0
        %1830 = vmatprep.mubr.f32.mxu0 0.0
        %v1831 = vand.u32 %v397, 4294901760
        %1832 = vmatmul.mubr.f32.gmra.mrb[0].mxu0 %v1831
        %v1833 = vpop.f32.mrb[0].mxu0
        %v1834 = vadd.f32 %v1751, %v1833
        %v1835 = vpop.f32.mrb[0].mxu0
        %1836 = vdwg.mxu0
        %1837 = vmatprep.subr.mxu0 0.0
        %v1838 = vand.u32 %v1412, 4294901760
        %1839 = vmatpush1.msra.mxu0 %v1838
        %1840 = vmatprep.subr.mxu0 0.0
        %v1841 = vand.u32 %v1413, 4294901760
        %1842 = vmatpush1.msra.mxu0 %v1841
        %1843 = vmatprep.subr.mxu0 0.0
        %1844 = vmatpush1.msra.mxu0 0.0
        %1845 = vmatprep.subr.mxu0 0.0
        %1846 = vmatpush1.msra.mxu0 0.0
        %1847 = vmatprep.subr.mxu0 0.0
        %1848 = vmatpush1.msra.mxu0 0.0
        %1849 = vmatprep.subr.mxu0 0.0
        %1850 = vmatpush1.msra.mxu0 0.0
        %1851 = vmatprep.subr.mxu0 0.0
        %1852 = vmatpush1.msra.mxu0 0.0
        %1853 = vmatprep.subr.mxu0 0.0
        %1854 = vmatpush1.msra.mxu0 0.0
        %1855 = vmatprep.subr.mxu0 0.0
        %1856 = vmatpush1.msra.mxu0 0.0
        %1857 = vmatprep.subr.mxu0 0.0
        %1858 = vmatpush1.msra.mxu0 0.0
        %1859 = vmatprep.subr.mxu0 0.0
        %1860 = vmatpush1.msra.mxu0 0.0
        %1861 = vmatprep.subr.mxu0 0.0
        %1862 = vmatpush1.msra.mxu0 0.0
        %1863 = vmatprep.subr.mxu0 0.0
        %1864 = vmatpush1.msra.mxu0 0.0
        %1865 = vmatprep.subr.mxu0 0.0
        %1866 = vmatpush1.msra.mxu0 0.0
        %1867 = vmatprep.subr.mxu0 0.0
        %1868 = vmatpush1.msra.mxu0 0.0
        %1869 = vmatprep.subr.mxu0 0.0
        %1870 = vmatpush1.msra.mxu0 0.0
        %1871 = vmatprep.subr.mxu0 0.0
        %1872 = vmatpush1.msra.mxu0 0.0
        %1873 = vmatprep.subr.mxu0 0.0
        %1874 = vmatpush1.msra.mxu0 0.0
        %1875 = vmatprep.subr.mxu0 0.0
        %1876 = vmatpush1.msra.mxu0 0.0
        %1877 = vmatprep.subr.mxu0 0.0
        %1878 = vmatpush1.msra.mxu0 0.0
        %1879 = vmatprep.subr.mxu0 0.0
        %1880 = vmatpush1.msra.mxu0 0.0
        %1881 = vmatprep.subr.mxu0 0.0
        %1882 = vmatpush1.msra.mxu0 0.0
        %1883 = vmatprep.subr.mxu0 0.0
        %1884 = vmatpush1.msra.mxu0 0.0
        %1885 = vmatprep.subr.mxu0 0.0
        %1886 = vmatpush1.msra.mxu0 0.0
        %1887 = vmatprep.subr.mxu0 0.0
        %1888 = vmatpush1.msra.mxu0 0.0
        %1889 = vmatprep.subr.mxu0 0.0
        %1890 = vmatpush1.msra.mxu0 0.0
        %1891 = vmatprep.subr.mxu0 0.0
        %1892 = vmatpush1.msra.mxu0 0.0
        %1893 = vmatprep.subr.mxu0 0.0
        %1894 = vmatpush1.msra.mxu0 0.0
        %1895 = vmatprep.subr.mxu0 0.0
        %1896 = vmatpush1.msra.mxu0 0.0
        %1897 = vmatprep.subr.mxu0 0.0
        %1898 = vmatpush1.msra.mxu0 0.0
        %1899 = vmatprep.subr.mxu0 0.0
        %1900 = vmatpush1.msra.mxu0 0.0
        %1901 = vmatprep.subr.mxu0 0.0
        %1902 = vmatpush1.msra.mxu0 0.0
        %1903 = vmatprep.mubr.f32.mxu0 0.0
        %v1904 = vand.u32 %v394, 4294901760
        %1905 = vmatmul.mubr.f32.gmra.mrb[0].mxu0 %v1904
        %v1906 = vpop.f32.mrb[0].mxu0
        %v1907 = vadd.f32 %v1828, %v1906
        %v1908 = vpop.f32.mrb[0].mxu0
        %1909 = vmatprep.mubr.f32.mxu0 0.0
        %v1910 = vand.u32 %v397, 4294901760
        %1911 = vmatmul.mubr.f32.gmra.mrb[0].mxu0 %v1910
        %v1912 = vpop.f32.mrb[0].mxu0
        %v1913 = vadd.f32 %v1834, %v1912
        %v1914 = vpop.f32.mrb[0].mxu0
        %1915 = vdwg.mxu0
        %v1917 = vsel %vm392, %v1907, 0
        %v1920 = vsel %vm392, %v1913, 0
        %1922 = vmatprep.subr.mxu0 0.0
        %v1923 = vand.u32 %v901, 4294901760
        %1924 = vmatpush1.msra.mxu0 %v1923
        %1925 = vmatprep.subr.mxu0 0.0
        %v1926 = vand.u32 %v902, 4294901760
        %1927 = vmatpush1.msra.mxu0 %v1926
        %1928 = vmatprep.subr.mxu0 0.0
        %1929 = vmatpush1.msra.mxu0 0.0
        %1930 = vmatprep.subr.mxu0 0.0
        %1931 = vmatpush1.msra.mxu0 0.0
        %1932 = vmatprep.subr.mxu0 0.0
        %1933 = vmatpush1.msra.mxu0 0.0
        %1934 = vmatprep.subr.mxu0 0.0
        %1935 = vmatpush1.msra.mxu0 0.0
        %1936 = vmatprep.subr.mxu0 0.0
        %1937 = vmatpush1.msra.mxu0 0.0
        %1938 = vmatprep.subr.mxu0 0.0
        %1939 = vmatpush1.msra.mxu0 0.0
        %1940 = vmatprep.subr.mxu0 0.0
        %1941 = vmatpush1.msra.mxu0 0.0
        %1942 = vmatprep.subr.mxu0 0.0
        %1943 = vmatpush1.msra.mxu0 0.0
        %1944 = vmatprep.subr.mxu0 0.0
        %1945 = vmatpush1.msra.mxu0 0.0
        %1946 = vmatprep.subr.mxu0 0.0
        %1947 = vmatpush1.msra.mxu0 0.0
        %1948 = vmatprep.subr.mxu0 0.0
        %1949 = vmatpush1.msra.mxu0 0.0
        %1950 = vmatprep.subr.mxu0 0.0
        %1951 = vmatpush1.msra.mxu0 0.0
        %1952 = vmatprep.subr.mxu0 0.0
        %1953 = vmatpush1.msra.mxu0 0.0
        %1954 = vmatprep.subr.mxu0 0.0
        %1955 = vmatpush1.msra.mxu0 0.0
        %1956 = vmatprep.subr.mxu0 0.0
        %1957 = vmatpush1.msra.mxu0 0.0
        %1958 = vmatprep.subr.mxu0 0.0
        %1959 = vmatpush1.msra.mxu0 0.0
        %1960 = vmatprep.subr.mxu0 0.0
        %1961 = vmatpush1.msra.mxu0 0.0
        %1962 = vmatprep.subr.mxu0 0.0
        %1963 = vmatpush1.msra.mxu0 0.0
        %1964 = vmatprep.subr.mxu0 0.0
        %1965 = vmatpush1.msra.mxu0 0.0
        %1966 = vmatprep.subr.mxu0 0.0
        %1967 = vmatpush1.msra.mxu0 0.0
        %1968 = vmatprep.subr.mxu0 0.0
        %1969 = vmatpush1.msra.mxu0 0.0
        %1970 = vmatprep.subr.mxu0 0.0
        %1971 = vmatpush1.msra.mxu0 0.0
        %1972 = vmatprep.subr.mxu0 0.0
        %1973 = vmatpush1.msra.mxu0 0.0
        %1974 = vmatprep.subr.mxu0 0.0
        %1975 = vmatpush1.msra.mxu0 0.0
        %1976 = vmatprep.subr.mxu0 0.0
        %1977 = vmatpush1.msra.mxu0 0.0
        %1978 = vmatprep.subr.mxu0 0.0
        %1979 = vmatpush1.msra.mxu0 0.0
        %1980 = vmatprep.subr.mxu0 0.0
        %1981 = vmatpush1.msra.mxu0 0.0
        %1982 = vmatprep.subr.mxu0 0.0
        %1983 = vmatpush1.msra.mxu0 0.0
        %1984 = vmatprep.subr.mxu0 0.0
        %1985 = vmatpush1.msra.mxu0 0.0
        %1986 = vmatprep.subr.mxu0 0.0
        %1987 = vmatpush1.msra.mxu0 0.0
        %1988 = vmatprep.mubr.f32.mxu0 0.0
        %v1989 = vand.u32 %v1917, 4294901760
        %v1990 = vsub.f32 %v1917, %v1989
        %v1991 = vand.u32 %v1990, 4294901760
        %v1992 = vsub.f32 %v1990, %v1991
        %v1993 = vand.u32 %v1992, 4294901760
        %1994 = vmatmul.mubr.f32.gmra.mrb[0].mxu0 %v1993
        %v1995 = vpop.f32.mrb[0].mxu0
        %v1996 = vadd.f32 0.0, %v1995
        %v1997 = vpop.f32.mrb[0].mxu0
        %1998 = vmatprep.mubr.f32.mxu0 0.0
        %v1999 = vand.u32 %v1920, 4294901760
        %v2000 = vsub.f32 %v1920, %v1999
        %v2001 = vand.u32 %v2000, 4294901760
        %v2002 = vsub.f32 %v2000, %v2001
        %v2003 = vand.u32 %v2002, 4294901760
        %2004 = vmatmul.mubr.f32.gmra.mrb[0].mxu0 %v2003
        %v2005 = vpop.f32.mrb[0].mxu0
        %v2006 = vadd.f32 0.0, %v2005
        %v2007 = vpop.f32.mrb[0].mxu0
        %2008 = vdwg.mxu0
        %2009 = vmatprep.subr.mxu0 0.0
        %v2010 = vand.u32 %v901, 4294901760
        %v2011 = vsub.f32 %v901, %v2010
        %v2012 = vand.u32 %v2011, 4294901760
        %v2013 = vsub.f32 %v2011, %v2012
        %v2014 = vand.u32 %v2013, 4294901760
        %2015 = vmatpush1.msra.mxu0 %v2014
        %2016 = vmatprep.subr.mxu0 0.0
        %v2017 = vand.u32 %v902, 4294901760
        %v2018 = vsub.f32 %v902, %v2017
        %v2019 = vand.u32 %v2018, 4294901760
        %v2020 = vsub.f32 %v2018, %v2019
        %v2021 = vand.u32 %v2020, 4294901760
        %2022 = vmatpush1.msra.mxu0 %v2021
        %2023 = vmatprep.subr.mxu0 0.0
        %2024 = vmatpush1.msra.mxu0 0.0
        %2025 = vmatprep.subr.mxu0 0.0
        %2026 = vmatpush1.msra.mxu0 0.0
        %2027 = vmatprep.subr.mxu0 0.0
        %2028 = vmatpush1.msra.mxu0 0.0
        %2029 = vmatprep.subr.mxu0 0.0
        %2030 = vmatpush1.msra.mxu0 0.0
        %2031 = vmatprep.subr.mxu0 0.0
        %2032 = vmatpush1.msra.mxu0 0.0
        %2033 = vmatprep.subr.mxu0 0.0
        %2034 = vmatpush1.msra.mxu0 0.0
        %2035 = vmatprep.subr.mxu0 0.0
        %2036 = vmatpush1.msra.mxu0 0.0
        %2037 = vmatprep.subr.mxu0 0.0
        %2038 = vmatpush1.msra.mxu0 0.0
        %2039 = vmatprep.subr.mxu0 0.0
        %2040 = vmatpush1.msra.mxu0 0.0
        %2041 = vmatprep.subr.mxu0 0.0
        %2042 = vmatpush1.msra.mxu0 0.0
        %2043 = vmatprep.subr.mxu0 0.0
        %2044 = vmatpush1.msra.mxu0 0.0
        %2045 = vmatprep.subr.mxu0 0.0
        %2046 = vmatpush1.msra.mxu0 0.0
        %2047 = vmatprep.subr.mxu0 0.0
        %2048 = vmatpush1.msra.mxu0 0.0
        %2049 = vmatprep.subr.mxu0 0.0
        %2050 = vmatpush1.msra.mxu0 0.0
        %2051 = vmatprep.subr.mxu0 0.0
        %2052 = vmatpush1.msra.mxu0 0.0
        %2053 = vmatprep.subr.mxu0 0.0
        %2054 = vmatpush1.msra.mxu0 0.0
        %2055 = vmatprep.subr.mxu0 0.0
        %2056 = vmatpush1.msra.mxu0 0.0
        %2057 = vmatprep.subr.mxu0 0.0
        %2058 = vmatpush1.msra.mxu0 0.0
        %2059 = vmatprep.subr.mxu0 0.0
        %2060 = vmatpush1.msra.mxu0 0.0
        %2061 = vmatprep.subr.mxu0 0.0
        %2062 = vmatpush1.msra.mxu0 0.0
        %2063 = vmatprep.subr.mxu0 0.0
        %2064 = vmatpush1.msra.mxu0 0.0
        %2065 = vmatprep.subr.mxu0 0.0
        %2066 = vmatpush1.msra.mxu0 0.0
        %2067 = vmatprep.subr.mxu0 0.0
        %2068 = vmatpush1.msra.mxu0 0.0
        %2069 = vmatprep.subr.mxu0 0.0
        %2070 = vmatpush1.msra.mxu0 0.0
        %2071 = vmatprep.subr.mxu0 0.0
        %2072 = vmatpush1.msra.mxu0 0.0
        %2073 = vmatprep.subr.mxu0 0.0
        %2074 = vmatpush1.msra.mxu0 0.0
        %2075 = vmatprep.subr.mxu0 0.0
        %2076 = vmatpush1.msra.mxu0 0.0
        %2077 = vmatprep.subr.mxu0 0.0
        %2078 = vmatpush1.msra.mxu0 0.0
        %2079 = vmatprep.subr.mxu0 0.0
        %2080 = vmatpush1.msra.mxu0 0.0
        %2081 = vmatprep.subr.mxu0 0.0
        %2082 = vmatpush1.msra.mxu0 0.0
        %2083 = vmatprep.mubr.f32.mxu0 0.0
        %v2084 = vand.u32 %v1917, 4294901760
        %2085 = vmatmul.mubr.f32.gmra.mrb[0].mxu0 %v2084
        %v2086 = vpop.f32.mrb[0].mxu0
        %v2087 = vadd.f32 %v1996, %v2086
        %v2088 = vpop.f32.mrb[0].mxu0
        %2089 = vmatprep.mubr.f32.mxu0 0.0
        %v2090 = vand.u32 %v1920, 4294901760
        %2091 = vmatmul.mubr.f32.gmra.mrb[0].mxu0 %v2090
        %v2092 = vpop.f32.mrb[0].mxu0
        %v2093 = vadd.f32 %v2006, %v2092
        %v2094 = vpop.f32.mrb[0].mxu0
        %2095 = vdwg.mxu0
        %2096 = vmatprep.subr.mxu0 0.0
        %v2097 = vand.u32 %v901, 4294901760
        %v2098 = vsub.f32 %v901, %v2097
        %2099 = vmatpush1.msra.mxu0 %v2098
        %2100 = vmatprep.subr.mxu0 0.0
        %v2101 = vand.u32 %v902, 4294901760
        %v2102 = vsub.f32 %v902, %v2101
        %2103 = vmatpush1.msra.mxu0 %v2102
        %2104 = vmatprep.subr.mxu0 0.0
        %2105 = vmatpush1.msra.mxu0 0.0
        %2106 = vmatprep.subr.mxu0 0.0
        %2107 = vmatpush1.msra.mxu0 0.0
        %2108 = vmatprep.subr.mxu0 0.0
        %2109 = vmatpush1.msra.mxu0 0.0
        %2110 = vmatprep.subr.mxu0 0.0
        %2111 = vmatpush1.msra.mxu0 0.0
        %2112 = vmatprep.subr.mxu0 0.0
        %2113 = vmatpush1.msra.mxu0 0.0
        %2114 = vmatprep.subr.mxu0 0.0
        %2115 = vmatpush1.msra.mxu0 0.0
        %2116 = vmatprep.subr.mxu0 0.0
        %2117 = vmatpush1.msra.mxu0 0.0
        %2118 = vmatprep.subr.mxu0 0.0
        %2119 = vmatpush1.msra.mxu0 0.0
        %2120 = vmatprep.subr.mxu0 0.0
        %2121 = vmatpush1.msra.mxu0 0.0
        %2122 = vmatprep.subr.mxu0 0.0
        %2123 = vmatpush1.msra.mxu0 0.0
        %2124 = vmatprep.subr.mxu0 0.0
        %2125 = vmatpush1.msra.mxu0 0.0
        %2126 = vmatprep.subr.mxu0 0.0
        %2127 = vmatpush1.msra.mxu0 0.0
        %2128 = vmatprep.subr.mxu0 0.0
        %2129 = vmatpush1.msra.mxu0 0.0
        %2130 = vmatprep.subr.mxu0 0.0
        %2131 = vmatpush1.msra.mxu0 0.0
        %2132 = vmatprep.subr.mxu0 0.0
        %2133 = vmatpush1.msra.mxu0 0.0
        %2134 = vmatprep.subr.mxu0 0.0
        %2135 = vmatpush1.msra.mxu0 0.0
        %2136 = vmatprep.subr.mxu0 0.0
        %2137 = vmatpush1.msra.mxu0 0.0
        %2138 = vmatprep.subr.mxu0 0.0
        %2139 = vmatpush1.msra.mxu0 0.0
        %2140 = vmatprep.subr.mxu0 0.0
        %2141 = vmatpush1.msra.mxu0 0.0
        %2142 = vmatprep.subr.mxu0 0.0
        %2143 = vmatpush1.msra.mxu0 0.0
        %2144 = vmatprep.subr.mxu0 0.0
        %2145 = vmatpush1.msra.mxu0 0.0
        %2146 = vmatprep.subr.mxu0 0.0
        %2147 = vmatpush1.msra.mxu0 0.0
        %2148 = vmatprep.subr.mxu0 0.0
        %2149 = vmatpush1.msra.mxu0 0.0
        %2150 = vmatprep.subr.mxu0 0.0
        %2151 = vmatpush1.msra.mxu0 0.0
        %2152 = vmatprep.subr.mxu0 0.0
        %2153 = vmatpush1.msra.mxu0 0.0
        %2154 = vmatprep.subr.mxu0 0.0
        %2155 = vmatpush1.msra.mxu0 0.0
        %2156 = vmatprep.subr.mxu0 0.0
        %2157 = vmatpush1.msra.mxu0 0.0
        %2158 = vmatprep.subr.mxu0 0.0
        %2159 = vmatpush1.msra.mxu0 0.0
        %2160 = vmatprep.subr.mxu0 0.0
        %2161 = vmatpush1.msra.mxu0 0.0
        %2162 = vmatprep.subr.mxu0 0.0
        %2163 = vmatpush1.msra.mxu0 0.0
        %2164 = vmatprep.mubr.f32.mxu0 0.0
        %v2165 = vand.u32 %v1917, 4294901760
        %v2166 = vsub.f32 %v1917, %v2165
        %2167 = vmatmul.mubr.f32.gmra.mrb[0].mxu0 %v2166
        %v2168 = vpop.f32.mrb[0].mxu0
        %v2169 = vadd.f32 %v2087, %v2168
        %v2170 = vpop.f32.mrb[0].mxu0
        %2171 = vmatprep.mubr.f32.mxu0 0.0
        %v2172 = vand.u32 %v1920, 4294901760
        %v2173 = vsub.f32 %v1920, %v2172
        %2174 = vmatmul.mubr.f32.gmra.mrb[0].mxu0 %v2173
        %v2175 = vpop.f32.mrb[0].mxu0
        %v2176 = vadd.f32 %v2093, %v2175
        %v2177 = vpop.f32.mrb[0].mxu0
        %2178 = vdwg.mxu0
        %2179 = vmatprep.subr.mxu0 0.0
        %v2180 = vand.u32 %v901, 4294901760
        %2181 = vmatpush1.msra.mxu0 %v2180
        %2182 = vmatprep.subr.mxu0 0.0
        %v2183 = vand.u32 %v902, 4294901760
        %2184 = vmatpush1.msra.mxu0 %v2183
        %2185 = vmatprep.subr.mxu0 0.0
        %2186 = vmatpush1.msra.mxu0 0.0
        %2187 = vmatprep.subr.mxu0 0.0
        %2188 = vmatpush1.msra.mxu0 0.0
        %2189 = vmatprep.subr.mxu0 0.0
        %2190 = vmatpush1.msra.mxu0 0.0
        %2191 = vmatprep.subr.mxu0 0.0
        %2192 = vmatpush1.msra.mxu0 0.0
        %2193 = vmatprep.subr.mxu0 0.0
        %2194 = vmatpush1.msra.mxu0 0.0
        %2195 = vmatprep.subr.mxu0 0.0
        %2196 = vmatpush1.msra.mxu0 0.0
        %2197 = vmatprep.subr.mxu0 0.0
        %2198 = vmatpush1.msra.mxu0 0.0
        %2199 = vmatprep.subr.mxu0 0.0
        %2200 = vmatpush1.msra.mxu0 0.0
        %2201 = vmatprep.subr.mxu0 0.0
        %2202 = vmatpush1.msra.mxu0 0.0
        %2203 = vmatprep.subr.mxu0 0.0
        %2204 = vmatpush1.msra.mxu0 0.0
        %2205 = vmatprep.subr.mxu0 0.0
        %2206 = vmatpush1.msra.mxu0 0.0
        %2207 = vmatprep.subr.mxu0 0.0
        %2208 = vmatpush1.msra.mxu0 0.0
        %2209 = vmatprep.subr.mxu0 0.0
        %2210 = vmatpush1.msra.mxu0 0.0
        %2211 = vmatprep.subr.mxu0 0.0
        %2212 = vmatpush1.msra.mxu0 0.0
        %2213 = vmatprep.subr.mxu0 0.0
        %2214 = vmatpush1.msra.mxu0 0.0
        %2215 = vmatprep.subr.mxu0 0.0
        %2216 = vmatpush1.msra.mxu0 0.0
        %2217 = vmatprep.subr.mxu0 0.0
        %2218 = vmatpush1.msra.mxu0 0.0
        %2219 = vmatprep.subr.mxu0 0.0
        %2220 = vmatpush1.msra.mxu0 0.0
        %2221 = vmatprep.subr.mxu0 0.0
        %2222 = vmatpush1.msra.mxu0 0.0
        %2223 = vmatprep.subr.mxu0 0.0
        %2224 = vmatpush1.msra.mxu0 0.0
        %2225 = vmatprep.subr.mxu0 0.0
        %2226 = vmatpush1.msra.mxu0 0.0
        %2227 = vmatprep.subr.mxu0 0.0
        %2228 = vmatpush1.msra.mxu0 0.0
        %2229 = vmatprep.subr.mxu0 0.0
        %2230 = vmatpush1.msra.mxu0 0.0
        %2231 = vmatprep.subr.mxu0 0.0
        %2232 = vmatpush1.msra.mxu0 0.0
        %2233 = vmatprep.subr.mxu0 0.0
        %2234 = vmatpush1.msra.mxu0 0.0
        %2235 = vmatprep.subr.mxu0 0.0
        %2236 = vmatpush1.msra.mxu0 0.0
        %2237 = vmatprep.subr.mxu0 0.0
        %2238 = vmatpush1.msra.mxu0 0.0
        %2239 = vmatprep.subr.mxu0 0.0
        %2240 = vmatpush1.msra.mxu0 0.0
        %2241 = vmatprep.subr.mxu0 0.0
        %2242 = vmatpush1.msra.mxu0 0.0
        %2243 = vmatprep.subr.mxu0 0.0
        %2244 = vmatpush1.msra.mxu0 0.0
        %2245 = vmatprep.mubr.f32.mxu0 0.0
        %v2246 = vand.u32 %v1917, 4294901760
        %v2247 = vsub.f32 %v1917, %v2246
        %v2248 = vand.u32 %v2247, 4294901760
        %2249 = vmatmul.mubr.f32.gmra.mrb[0].mxu0 %v2248
        %v2250 = vpop.f32.mrb[0].mxu0
        %v2251 = vadd.f32 %v2169, %v2250
        %v2252 = vpop.f32.mrb[0].mxu0
        %2253 = vmatprep.mubr.f32.mxu0 0.0
        %v2254 = vand.u32 %v1920, 4294901760
        %v2255 = vsub.f32 %v1920, %v2254
        %v2256 = vand.u32 %v2255, 4294901760
        %2257 = vmatmul.mubr.f32.gmra.mrb[0].mxu0 %v2256
        %v2258 = vpop.f32.mrb[0].mxu0
        %v2259 = vadd.f32 %v2176, %v2258
        %v2260 = vpop.f32.mrb[0].mxu0
        %2261 = vdwg.mxu0
        %2262 = vmatprep.subr.mxu0 0.0
        %v2263 = vand.u32 %v901, 4294901760
        %v2264 = vsub.f32 %v901, %v2263
        %v2265 = vand.u32 %v2264, 4294901760
        %2266 = vmatpush1.msra.mxu0 %v2265
        %2267 = vmatprep.subr.mxu0 0.0
        %v2268 = vand.u32 %v902, 4294901760
        %v2269 = vsub.f32 %v902, %v2268
        %v2270 = vand.u32 %v2269, 4294901760
        %2271 = vmatpush1.msra.mxu0 %v2270
        %2272 = vmatprep.subr.mxu0 0.0
        %2273 = vmatpush1.msra.mxu0 0.0
        %2274 = vmatprep.subr.mxu0 0.0
        %2275 = vmatpush1.msra.mxu0 0.0
        %2276 = vmatprep.subr.mxu0 0.0
        %2277 = vmatpush1.msra.mxu0 0.0
        %2278 = vmatprep.subr.mxu0 0.0
        %2279 = vmatpush1.msra.mxu0 0.0
        %2280 = vmatprep.subr.mxu0 0.0
        %2281 = vmatpush1.msra.mxu0 0.0
        %2282 = vmatprep.subr.mxu0 0.0
        %2283 = vmatpush1.msra.mxu0 0.0
        %2284 = vmatprep.subr.mxu0 0.0
        %2285 = vmatpush1.msra.mxu0 0.0
        %2286 = vmatprep.subr.mxu0 0.0
        %2287 = vmatpush1.msra.mxu0 0.0
        %2288 = vmatprep.subr.mxu0 0.0
        %2289 = vmatpush1.msra.mxu0 0.0
        %2290 = vmatprep.subr.mxu0 0.0
        %2291 = vmatpush1.msra.mxu0 0.0
        %2292 = vmatprep.subr.mxu0 0.0
        %2293 = vmatpush1.msra.mxu0 0.0
        %2294 = vmatprep.subr.mxu0 0.0
        %2295 = vmatpush1.msra.mxu0 0.0
        %2296 = vmatprep.subr.mxu0 0.0
        %2297 = vmatpush1.msra.mxu0 0.0
        %2298 = vmatprep.subr.mxu0 0.0
        %2299 = vmatpush1.msra.mxu0 0.0
        %2300 = vmatprep.subr.mxu0 0.0
        %2301 = vmatpush1.msra.mxu0 0.0
        %2302 = vmatprep.subr.mxu0 0.0
        %2303 = vmatpush1.msra.mxu0 0.0
        %2304 = vmatprep.subr.mxu0 0.0
        %2305 = vmatpush1.msra.mxu0 0.0
        %2306 = vmatprep.subr.mxu0 0.0
        %2307 = vmatpush1.msra.mxu0 0.0
        %2308 = vmatprep.subr.mxu0 0.0
        %2309 = vmatpush1.msra.mxu0 0.0
        %2310 = vmatprep.subr.mxu0 0.0
        %2311 = vmatpush1.msra.mxu0 0.0
        %2312 = vmatprep.subr.mxu0 0.0
        %2313 = vmatpush1.msra.mxu0 0.0
        %2314 = vmatprep.subr.mxu0 0.0
        %2315 = vmatpush1.msra.mxu0 0.0
        %2316 = vmatprep.subr.mxu0 0.0
        %2317 = vmatpush1.msra.mxu0 0.0
        %2318 = vmatprep.subr.mxu0 0.0
        %2319 = vmatpush1.msra.mxu0 0.0
        %2320 = vmatprep.subr.mxu0 0.0
        %2321 = vmatpush1.msra.mxu0 0.0
        %2322 = vmatprep.subr.mxu0 0.0
        %2323 = vmatpush1.msra.mxu0 0.0
        %2324 = vmatprep.subr.mxu0 0.0
        %2325 = vmatpush1.msra.mxu0 0.0
        %2326 = vmatprep.subr.mxu0 0.0
        %2327 = vmatpush1.msra.mxu0 0.0
        %2328 = vmatprep.subr.mxu0 0.0
        %2329 = vmatpush1.msra.mxu0 0.0
        %2330 = vmatprep.subr.mxu0 0.0
        %2331 = vmatpush1.msra.mxu0 0.0
        %2332 = vmatprep.mubr.f32.mxu0 0.0
        %v2333 = vand.u32 %v1917, 4294901760
        %2334 = vmatmul.mubr.f32.gmra.mrb[0].mxu0 %v2333
        %v2335 = vpop.f32.mrb[0].mxu0
        %v2336 = vadd.f32 %v2251, %v2335
        %v2337 = vpop.f32.mrb[0].mxu0
        %2338 = vmatprep.mubr.f32.mxu0 0.0
        %v2339 = vand.u32 %v1920, 4294901760
        %2340 = vmatmul.mubr.f32.gmra.mrb[0].mxu0 %v2339
        %v2341 = vpop.f32.mrb[0].mxu0
        %v2342 = vadd.f32 %v2259, %v2341
        %v2343 = vpop.f32.mrb[0].mxu0
        %2344 = vdwg.mxu0
        %2345 = vmatprep.subr.mxu0 0.0
        %v2346 = vand.u32 %v901, 4294901760
        %2347 = vmatpush1.msra.mxu0 %v2346
        %2348 = vmatprep.subr.mxu0 0.0
        %v2349 = vand.u32 %v902, 4294901760
        %2350 = vmatpush1.msra.mxu0 %v2349
        %2351 = vmatprep.subr.mxu0 0.0
        %2352 = vmatpush1.msra.mxu0 0.0
        %2353 = vmatprep.subr.mxu0 0.0
        %2354 = vmatpush1.msra.mxu0 0.0
        %2355 = vmatprep.subr.mxu0 0.0
        %2356 = vmatpush1.msra.mxu0 0.0
        %2357 = vmatprep.subr.mxu0 0.0
        %2358 = vmatpush1.msra.mxu0 0.0
        %2359 = vmatprep.subr.mxu0 0.0
        %2360 = vmatpush1.msra.mxu0 0.0
        %2361 = vmatprep.subr.mxu0 0.0
        %2362 = vmatpush1.msra.mxu0 0.0
        %2363 = vmatprep.subr.mxu0 0.0
        %2364 = vmatpush1.msra.mxu0 0.0
        %2365 = vmatprep.subr.mxu0 0.0
        %2366 = vmatpush1.msra.mxu0 0.0
        %2367 = vmatprep.subr.mxu0 0.0
        %2368 = vmatpush1.msra.mxu0 0.0
        %2369 = vmatprep.subr.mxu0 0.0
        %2370 = vmatpush1.msra.mxu0 0.0
        %2371 = vmatprep.subr.mxu0 0.0
        %2372 = vmatpush1.msra.mxu0 0.0
        %2373 = vmatprep.subr.mxu0 0.0
        %2374 = vmatpush1.msra.mxu0 0.0
        %2375 = vmatprep.subr.mxu0 0.0
        %2376 = vmatpush1.msra.mxu0 0.0
        %2377 = vmatprep.subr.mxu0 0.0
        %2378 = vmatpush1.msra.mxu0 0.0
        %2379 = vmatprep.subr.mxu0 0.0
        %2380 = vmatpush1.msra.mxu0 0.0
        %2381 = vmatprep.subr.mxu0 0.0
        %2382 = vmatpush1.msra.mxu0 0.0
        %2383 = vmatprep.subr.mxu0 0.0
        %2384 = vmatpush1.msra.mxu0 0.0
        %2385 = vmatprep.subr.mxu0 0.0
        %2386 = vmatpush1.msra.mxu0 0.0
        %2387 = vmatprep.subr.mxu0 0.0
        %2388 = vmatpush1.msra.mxu0 0.0
        %2389 = vmatprep.subr.mxu0 0.0
        %2390 = vmatpush1.msra.mxu0 0.0
        %2391 = vmatprep.subr.mxu0 0.0
        %2392 = vmatpush1.msra.mxu0 0.0
        %2393 = vmatprep.subr.mxu0 0.0
        %2394 = vmatpush1.msra.mxu0 0.0
        %2395 = vmatprep.subr.mxu0 0.0
        %2396 = vmatpush1.msra.mxu0 0.0
        %2397 = vmatprep.subr.mxu0 0.0
        %2398 = vmatpush1.msra.mxu0 0.0
        %2399 = vmatprep.subr.mxu0 0.0
        %2400 = vmatpush1.msra.mxu0 0.0
        %2401 = vmatprep.subr.mxu0 0.0
        %2402 = vmatpush1.msra.mxu0 0.0
        %2403 = vmatprep.subr.mxu0 0.0
        %2404 = vmatpush1.msra.mxu0 0.0
        %2405 = vmatprep.subr.mxu0 0.0
        %2406 = vmatpush1.msra.mxu0 0.0
        %2407 = vmatprep.subr.mxu0 0.0
        %2408 = vmatpush1.msra.mxu0 0.0
        %2409 = vmatprep.subr.mxu0 0.0
        %2410 = vmatpush1.msra.mxu0 0.0
        %2411 = vmatprep.mubr.f32.mxu0 0.0
        %v2412 = vand.u32 %v1917, 4294901760
        %2413 = vmatmul.mubr.f32.gmra.mrb[0].mxu0 %v2412
        %v2414 = vpop.f32.mrb[0].mxu0
        %v2415 = vadd.f32 %v2336, %v2414
        %v2416 = vpop.f32.mrb[0].mxu0
        %2417 = vmatprep.mubr.f32.mxu0 0.0
        %v2418 = vand.u32 %v1920, 4294901760
        %2419 = vmatmul.mubr.f32.gmra.mrb[0].mxu0 %v2418
        %v2420 = vpop.f32.mrb[0].mxu0
        %v2421 = vadd.f32 %v2342, %v2420
        %v2422 = vpop.f32.mrb[0].mxu0
        %2423 = vdwg.mxu0
        %v2424 = vcombine.high %v1402, 0.0
        %v2426 = vunpack.c.l.s4 1983009808
        %v2427 = vunpack.c.0.s8 %v2426
        %v2428 = vlaneseq
        %v2429 = vshrl.u32 %v2428, 7
        %v2430 = vsub.s32 %v2427, %v2429
        %v2431 = vrot.slane %v1402, %v2430
        %v2433 = vunpack.c.l.s4 1983009808
        %v2434 = vunpack.c.0.s8 %v2433
        %v2435 = vlaneseq
        %v2436 = vshrl.u32 %v2435, 7
        %v2437 = vsub.s32 %v2434, %v2436
        %v2438 = vrot.slane %v2424, %v2437
        %v2439 = vcombine.high %v2415, 0.0
        %v2441 = vunpack.c.l.s4 1983009808
        %v2442 = vunpack.c.0.s8 %v2441
        %v2443 = vlaneseq
        %v2444 = vshrl.u32 %v2443, 7
        %v2445 = vsub.s32 %v2442, %v2444
        %v2446 = vrot.slane %v2415, %v2445
        %v2448 = vunpack.c.l.s4 1983009808
        %v2449 = vunpack.c.0.s8 %v2448
        %v2450 = vlaneseq
        %v2451 = vshrl.u32 %v2450, 7
        %v2452 = vsub.s32 %v2449, %v2451
        %v2453 = vrot.slane %v2439, %v2452
        %v2454 = vcombine.low %v2431, %v2446
        %v2455 = vcombine.high %v2431, %v2446
        %v2457 = vunpack.c.l.s4 1934713408
        %v2458 = vunpack.c.0.s8 %v2457
        %v2459 = vlaneseq
        %v2460 = vshrl.u32 %v2459, 7
        %v2461 = vsub.s32 %v2458, %v2460
        %v2462 = vrot.slane %v2454, %v2461
        %v2464 = vunpack.c.l.s4 1934713408
        %v2465 = vunpack.c.0.s8 %v2464
        %v2466 = vlaneseq
        %v2467 = vshrl.u32 %v2466, 7
        %v2468 = vsub.s32 %v2465, %v2467
        %v2469 = vrot.slane %v2455, %v2468
        %v2470 = vcombine.low %v2438, %v2453
        %v2471 = vcombine.high %v2438, %v2453
        %v2473 = vunpack.c.l.s4 1934713408
        %v2474 = vunpack.c.0.s8 %v2473
        %v2475 = vlaneseq
        %v2476 = vshrl.u32 %v2475, 7
        %v2477 = vsub.s32 %v2474, %v2476
        %v2478 = vrot.slane %v2470, %v2477
        %v2480 = vunpack.c.l.s4 1934713408
        %v2481 = vunpack.c.0.s8 %v2480
        %v2482 = vlaneseq
        %v2483 = vshrl.u32 %v2482, 7
        %v2484 = vsub.s32 %v2481, %v2483
        %v2485 = vrot.slane %v2471, %v2484
        %v2486 = vcombine.high %v2462, 0.0
        %v2487 = vcombine.high %v2469, 0.0
        %v2488 = vcombine.high %v2478, 0.0
        %v2489 = vcombine.high %v2485, 0.0
        %v2490 = vcombine.high %v1408, 0.0
        %v2492 = vunpack.c.l.s4 1983009808
        %v2493 = vunpack.c.0.s8 %v2492
        %v2494 = vlaneseq
        %v2495 = vshrl.u32 %v2494, 7
        %v2496 = vsub.s32 %v2493, %v2495
        %v2497 = vrot.slane %v1408, %v2496
        %v2499 = vunpack.c.l.s4 1983009808
        %v2500 = vunpack.c.0.s8 %v2499
        %v2501 = vlaneseq
        %v2502 = vshrl.u32 %v2501, 7
        %v2503 = vsub.s32 %v2500, %v2502
        %v2504 = vrot.slane %v2490, %v2503
        %v2505 = vcombine.high %v2421, 0.0
        %v2507 = vunpack.c.l.s4 1983009808
        %v2508 = vunpack.c.0.s8 %v2507
        %v2509 = vlaneseq
        %v2510 = vshrl.u32 %v2509, 7
        %v2511 = vsub.s32 %v2508, %v2510
        %v2512 = vrot.slane %v2421, %v2511
        %v2514 = vunpack.c.l.s4 1983009808
        %v2515 = vunpack.c.0.s8 %v2514
        %v2516 = vlaneseq
        %v2517 = vshrl.u32 %v2516, 7
        %v2518 = vsub.s32 %v2515, %v2517
        %v2519 = vrot.slane %v2505, %v2518
        %v2520 = vcombine.low %v2497, %v2512
        %v2521 = vcombine.high %v2497, %v2512
        %v2523 = vunpack.c.l.s4 1934713408
        %v2524 = vunpack.c.0.s8 %v2523
        %v2525 = vlaneseq
        %v2526 = vshrl.u32 %v2525, 7
        %v2527 = vsub.s32 %v2524, %v2526
        %v2528 = vrot.slane %v2520, %v2527
        %v2530 = vunpack.c.l.s4 1934713408
        %v2531 = vunpack.c.0.s8 %v2530
        %v2532 = vlaneseq
        %v2533 = vshrl.u32 %v2532, 7
        %v2534 = vsub.s32 %v2531, %v2533
        %v2535 = vrot.slane %v2521, %v2534
        %v2536 = vcombine.low %v2504, %v2519
        %v2537 = vcombine.high %v2504, %v2519
        %v2539 = vunpack.c.l.s4 1934713408
        %v2540 = vunpack.c.0.s8 %v2539
        %v2541 = vlaneseq
        %v2542 = vshrl.u32 %v2541, 7
        %v2543 = vsub.s32 %v2540, %v2542
        %v2544 = vrot.slane %v2536, %v2543
        %v2546 = vunpack.c.l.s4 1934713408
        %v2547 = vunpack.c.0.s8 %v2546
        %v2548 = vlaneseq
        %v2549 = vshrl.u32 %v2548, 7
        %v2550 = vsub.s32 %v2547, %v2549
        %v2551 = vrot.slane %v2537, %v2550
        %v2552 = vcombine.high %v2528, 0.0
        %v2553 = vcombine.high %v2535, 0.0
        %v2554 = vcombine.high %v2544, 0.0
        %v2555 = vcombine.high %v2551, 0.0
        %2557 = vrot.lane.b32.xlu0 %v2486, 32
        %v2558 = vpop.permute.xlu0 %2557
        %2561 = vrot.lane.b32.xlu0 %v2469, 64
        %v2562 = vpop.permute.xlu0 %2561
        %2565 = vrot.lane.b32.xlu0 %v2487, 96
        %v2566 = vpop.permute.xlu0 %2565
        %2569 = vrot.lane.b32.xlu0 %v2488, 32
        %v2570 = vpop.permute.xlu0 %2569
        %2573 = vrot.lane.b32.xlu0 %v2485, 64
        %v2574 = vpop.permute.xlu0 %2573
        %2577 = vrot.lane.b32.xlu0 %v2489, 96
        %v2578 = vpop.permute.xlu0 %2577
        %2581 = vrot.lane.b32.xlu0 %v2552, 32
        %v2582 = vpop.permute.xlu0 %2581
        %2585 = vrot.lane.b32.xlu0 %v2535, 64
        %v2586 = vpop.permute.xlu0 %2585
        %2589 = vrot.lane.b32.xlu0 %v2553, 96
        %v2590 = vpop.permute.xlu0 %2589
        %2593 = vrot.lane.b32.xlu0 %v2554, 32
        %v2594 = vpop.permute.xlu0 %2593
        %2597 = vrot.lane.b32.xlu0 %v2551, 64
        %v2598 = vpop.permute.xlu0 %2597
        %2601 = vrot.lane.b32.xlu0 %v2555, 96
        %v2602 = vpop.permute.xlu0 %2601
        %vm2604 = vcmask 261120
        %v2605 = vsel %vm2604, %v2462, %v2558
        %vm2606 = vcmask 523264
        %v2607 = vsel %vm2606, %v2605, %v2562
        %vm2608 = vcmask 785408
        %v2609 = vsel %vm2608, %v2607, %v2566
        %v2610 = vsel %vm2604, %v2478, %v2570
        %v2611 = vsel %vm2606, %v2610, %v2574
        %v2612 = vsel %vm2608, %v2611, %v2578
        %v2613 = vsel %vm2604, %v2528, %v2582
        %v2614 = vsel %vm2606, %v2613, %v2586
        %v2615 = vsel %vm2608, %v2614, %v2590
        %v2616 = vsel %vm2604, %v2544, %v2594
        %v2617 = vsel %vm2606, %v2616, %v2598
        %v2618 = vsel %vm2608, %v2617, %v2602
        %v2623 = vcombine.low %v2609, %v2612
        %v2624 = vcombine.low %v2615, %v2618
        %v2626 = vunpack.c.l.s4 1983009808
        %v2627 = vunpack.c.0.s8 %v2626
        %v2628 = vlaneseq
        %v2629 = vshrl.u32 %v2628, 7
        %v2630 = vsub.s32 %v2627, %v2629
        %v2631 = vrot.slane %v2623, %v2630
        %v2633 = vunpack.c.l.s4 1983009808
        %v2634 = vunpack.c.0.s8 %v2633
        %v2635 = vlaneseq
        %v2636 = vshrl.u32 %v2635, 7
        %v2637 = vsub.s32 %v2634, %v2636
        %v2638 = vrot.slane %v2624, %v2637
        %v2639 = vcombine.low %v2631, %v2638
        %2641 = vst [vmem:[%s299] sm:$0xff] %v2639
        %s2642 = sand.u32 %s161, 1
        %s2643 = scalar_lea.sflag [#allocation5], %s2642
        %s2644 = sand.u32 %s161, 1
        %s2645 = smul.addr %s2644, 8
        %s2646 = scalar_lea.vmem [#allocation10], %s2645
        // Predicated region
        $region57: #{tpu_custom_call.1} parent=39 // pred_check
          %p2647 = pneg %p171
        $region58: #{tpu_custom_call.1} parent=39 // pred_check_branch
          %2649 = sbr.rel (%p2647) target = $region60
        $region59: #{tpu_custom_call.1} parent=39 // pred_region
          %s2650 = smul.u32 4, %s29
          %s2652 = ssub.s32 128, 128
          %2653 = vsyncadd %s2643, %s2652
          %s2654 = smul.addr %s28, 8
          %s2655 = sadd.s32 %s2650, %s2654
          %s2656 = smul.addr %s2655, 32
          %s2657 = scalar_lea.hbm %s5, %s2656
          %s2659 = sshll.u32 %s2646, 4
          %s2660 = int_to_ptr.vmem [resolvable:$true] %s2659
          %2662 = dma.vmem_to_hbm [thread:$0]  %s2660, 128, %s2657, %s2643
        $region60: #{tpu_custom_call.1} parent=39 // pred_fallthru
          _
      $region40: #{tpu_custom_call.1} parent=5 // pred_fallthru
        _
      %p2663 = scmp.le.s32.totalorder 2, %s19
      // Predicated region
      $region61: #{tpu_custom_call.1} parent=5 // pred_check
        %p2664 = pneg %p2663
      $region62: #{tpu_custom_call.1} parent=5 // pred_check_branch
        %2666 = sbr.rel (%p2664) target = $region64
      $region63: #{tpu_custom_call.1} parent=5 // pred_region
        %s2667 = ssub.s32 %s19, 2
        // Predicated region
        $region65: #{tpu_custom_call.1} parent=63 // pred_check
          %p2668 = pneg %p177
        $region66: #{tpu_custom_call.1} parent=63 // pred_check_branch
          %2670 = sbr.rel (%p2668) target = $region68
        $region67: #{tpu_custom_call.1} parent=63 // pred_region
          %s2671 = sand.u32 %s162, 1
          %s2672 = scalar_lea.sflag [#allocation5], %s2671
          %s2673 = sand.u32 %s162, 1
          %s2674 = smul.addr %s2673, 8
          %s2675 = scalar_lea.vmem [#allocation10], %s2674
          %2676 = dma.done %s2672, 128
        $region68: #{tpu_custom_call.1} parent=63 // pred_fallthru
          _
      $region64: #{tpu_custom_call.1} parent=5 // pred_fallthru
        _
    $region6: #{tpu_custom_call.1} parent=1 // loop_footer
      %s23 = sadd.s32 1, %s19
    $region7: #{tpu_custom_call.1} parent=1 // loop_footer_branch
      %18 = sbr.rel target = $region3
    $region8: #{tpu_custom_call.1} parent=1 // loop_exit
      _
    %2677 = vsyncpa [#allocation4], 1
    %s2678 = scalar_lea.sflag [#allocation4], 1
    %2679 = vsyncpa %s2678, 1
    %2680 = vsyncpa [#allocation5], 1
    %s2681 = scalar_lea.sflag [#allocation5], 1
    %2682 = vsyncpa %s2681, 1
    %2683 = vsyncpa [#allocation6], 1
    %s2684 = scalar_lea.sflag [#allocation6], 1
    %2685 = vsyncpa %s2684, 1
    %2686 = vsyncpa [#allocation9], 1

</llo_original>
